<compile_context>
chip_gen: v5e
topology: v5e:2x2
jax: 0.10.0
libtpu: 0.0.40
codegen_flags: <defaults>
</compile_context>

<pallas_src>
import functools

import jax
import jax.numpy as jnp
from jax.experimental import pallas as pl
from jax.experimental.pallas import tpu as pltpu

S_FIXED = 225   # layer_last = nn.Linear(225, 1)
S_PAD = 232     # next multiple of 8 (sublane alignment for the flatten)


# ----------------------------------------------------------------------------
# Single fused kernel invocation (no grid):
#   refs = (x_flat,
#           w_0, b_0, ..., w_{H-1}, b_{H-1},   # hidden layers (with ReLU)
#           WL,                                 # (B, B*S_PAD) per-sample w_last
#           w_final,                            # last nn.Linear of self.layers
#           c,                                  # (1, O) folded bias constant
#           o_ref)                              # (B, O)
# ----------------------------------------------------------------------------
def _fused_mlp_kernel(*refs, num_hidden):
    x_ref = refs[0]
    hidden_refs = refs[1:1 + 2 * num_hidden]
    wl_ref = refs[1 + 2 * num_hidden]       # (B, B*S_PAD)
    wfin_ref = refs[2 + 2 * num_hidden]     # (K_last, O)
    c_ref = refs[3 + 2 * num_hidden]        # (1, O)
    o_ref = refs[4 + 2 * num_hidden]        # (B, O)

    # Hidden layers on the whole flattened batch slab (MXU, f32 accumulation).
    h = x_ref[...]                          # (B*S_PAD, D)
    for i in range(num_hidden):
        w = hidden_refs[2 * i][...]         # (K, N)
        b = hidden_refs[2 * i + 1][...]     # (1, N)
        h = jnp.maximum(
            jnp.dot(h, w, preferred_element_type=jnp.float32) + b, 0.0)

    # Per-sample weighted S-reduction as ONE MXU matmul (block-diagonal WL),
    # then the last linear layer on the tiny (B, K_last) result.
    z = jnp.dot(wl_ref[...], h, preferred_element_type=jnp.float32)      # (B, K_last)
    y = jnp.dot(z, wfin_ref[...], preferred_element_type=jnp.float32) + c_ref[...]
    o_ref[...] = y.astype(o_ref.dtype)                                    # (B, O)


# ----------------------------------------------------------------------------
# Wrapper: one pallas_call for the whole forward pass.
# ----------------------------------------------------------------------------
def mlp_forward(x, params):
    # x: (B0, B1, S=225, input_dim)
    B0, B1, S, D = x.shape
    assert S == S_FIXED, "layer_last is Linear(225, 1); dim 2 must be 225"
    ws, bs = params["ws"], params["bs"]
    num_layers = len(ws)
    O = ws[-1].shape[1]
    B = B0 * B1

    # Flatten to a tile-clean (B*S_PAD, D) slab.  Padded rows are zero.
    x_flat = jnp.pad(x.reshape(B, S, D), ((0, 0), (0, S_PAD - S), (0, 0)))
    x_flat = x_flat.reshape(B * S_PAD, D)

    # Block-diagonal per-sample reduction matrix: WL[b, b*S_PAD + s] = w_last[s]
    # for s < 225, zero on padded columns.
    wl_pad = jnp.pad(params["w_last"][:, 0], (0, S_PAD - S))              # (S_PAD,)
    WL = jnp.kron(jnp.eye(B, dtype=jnp.float32), wl_pad[None, :])         # (B, B*S_PAD)

    # Fold biases of the (ReLU-free) last layer + layer_last into one constant:
    #   y = (WL @ h_{L-2}) @ W_{L-1} + sum(w_last) * b_{L-1} + b_last
    sum_wl = jnp.sum(params["w_last"])
    c = (sum_wl * bs[-1] + params["b_last"][0]).reshape(1, O)             # (1, O)

    operands = [x_flat]
    for w, b in zip(ws[:-1], bs[:-1]):                                    # hidden layers
        operands += [w, b.reshape(1, -1)]
    operands += [WL, ws[-1], c]

    kernel = functools.partial(_fused_mlp_kernel, num_hidden=num_layers - 1)
    # NOTE: for large production batches, switch to a grid over row-chunks of
    # x_flat marked "parallel" so v7x's two TensorCores split the work; at this
    # footprint a single block on one core is fastest.
    y = pl.pallas_call(
        kernel,
        out_shape=jax.ShapeDtypeStruct((B, O), jnp.float32),
        compiler_params=pltpu.CompilerParams(
            vmem_limit_bytes=16 << 20,   # footprint is <1 MiB; plenty of headroom
        ),
    )(*operands)

    return y.reshape(B0, B1, 1, O)


# ----------------------------------------------------------------------------
# Parameter construction (deterministic, synthetic) matching MLP.__init__
# ----------------------------------------------------------------------------
def init_mlp_params(key, input_dim, hidden_dim, output_dim, num_layers):
    dims_in = [input_dim] + [hidden_dim] * (num_layers - 1)
    dims_out = [hidden_dim] * (num_layers - 1) + [output_dim]
    ws, bs = [], []
    for n_in, n_out in zip(dims_in, dims_out):
        key, kw, kb = jax.random.split(key, 3)
        # store weight as (in, out) so the kernel does x @ W directly
        ws.append(jax.random.normal(kw, (n_in, n_out), jnp.float32) * 0.05)
        bs.append(jax.random.normal(kb, (n_out,), jnp.float32) * 0.05)
    key, kw, kb = jax.random.split(key, 3)
    w_last = jax.random.normal(kw, (225, 1), jnp.float32) * 0.05   # Linear(225, 1)
    b_last = jax.random.normal(kb, (1,), jnp.float32) * 0.05
    return {"ws": ws, "bs": bs, "w_last": w_last, "b_last": b_last}


# Pure-JAX reference for correctness checking (same math as the torch module).
def mlp_forward_ref(x, params):
    num_layers = len(params["ws"])
    h = x
    for i, (w, b) in enumerate(zip(params["ws"], params["bs"])):
        h = h @ w + b
        if i < num_layers - 1:
            h = jnp.maximum(h, 0.0)
    ht = jnp.swapaxes(h, 2, 3)                                   # (B0, B1, O, 225)
    y = ht @ params["w_last"] + params["b_last"]                 # (B0, B1, O, 1)
    return jnp.swapaxes(y, 2, 3)                                 # (B0, B1, 1, O)


if __name__ == "__main__":
    key = jax.random.PRNGKey(0)
    kx, kp = jax.random.split(key)

    # Small shapes consistent with the module: (batch, heads, S=225, input_dim)
    B0, B1, S = 2, 3, 225
    input_dim, hidden_dim, output_dim, num_layers = 16, 32, 8, 3

    x = jax.random.normal(kx, (B0, B1, S, input_dim), jnp.float32)
    params = init_mlp_params(kp, input_dim, hidden_dim, output_dim, num_layers)

    out = mlp_forward(x, params)
    out = jax.block_until_ready(out)

    ref = mlp_forward_ref(x, params)
    assert out.shape == (B0, B1, 1, output_dim), out.shape
    assert jnp.allclose(out, ref, atol=1e-4, rtol=1e-4), "mismatch vs reference"

    print("KERNEL_OK")
</pallas_src>

<mosaic_0001>
module attributes {stable_mosaic.version = 11 : i64} {
  func.func @_fused_mlp_kernel(%arg0: memref<1392x16xf32, #tpu.memory_space<vmem>>, %arg1: memref<16x32xf32, #tpu.memory_space<vmem>>, %arg2: memref<1x32xf32, #tpu.memory_space<vmem>>, %arg3: memref<32x32xf32, #tpu.memory_space<vmem>>, %arg4: memref<1x32xf32, #tpu.memory_space<vmem>>, %arg5: memref<6x1392xf32, #tpu.memory_space<vmem>>, %arg6: memref<32x8xf32, #tpu.memory_space<vmem>>, %arg7: memref<1x8xf32, #tpu.memory_space<vmem>>, %arg8: memref<6x8xf32, #tpu.memory_space<vmem>>) attributes {dimension_semantics = [], scalar_prefetch = 0 : i64, scratch_operands = 0 : i64, tpu.core_type = #tpu.core_type<tc>} {
    %c0 = arith.constant 0 : index
    %c0_0 = arith.constant 0 : index
    %0 = vector.load %arg0[%c0, %c0_0] : memref<1392x16xf32, #tpu.memory_space<vmem>>, vector<1392x16xf32>
    %c0_1 = arith.constant 0 : index
    %c0_2 = arith.constant 0 : index
    %1 = vector.load %arg1[%c0_1, %c0_2] : memref<16x32xf32, #tpu.memory_space<vmem>>, vector<16x32xf32>
    %c0_3 = arith.constant 0 : index
    %c0_4 = arith.constant 0 : index
    %2 = vector.load %arg2[%c0_3, %c0_4] : memref<1x32xf32, #tpu.memory_space<vmem>>, vector<1x32xf32>
    %cst = arith.constant dense<0.000000e+00> : vector<1392x32xf32>
    %3 = tpu.matmul %0, %1, %cst {dimension_numbers = #tpu.dot_dimension_numbers<[1], [0], [0], [1], [0, 0, 1, 1], [], []>} : vector<1392x16xf32>, vector<16x32xf32>, vector<1392x32xf32> -> vector<1392x32xf32>
    %4 = vector.broadcast %2 : vector<1x32xf32> to vector<1392x32xf32>
    %5 = arith.addf %3, %4 : vector<1392x32xf32>
    %cst_5 = arith.constant 0.000000e+00 : f32
    %6 = vector.broadcast %cst_5 : f32 to vector<1392x32xf32>
    %7 = arith.maximumf %5, %6 : vector<1392x32xf32>
    %c0_6 = arith.constant 0 : index
    %c0_7 = arith.constant 0 : index
    %8 = vector.load %arg3[%c0_6, %c0_7] : memref<32x32xf32, #tpu.memory_space<vmem>>, vector<32x32xf32>
    %c0_8 = arith.constant 0 : index
    %c0_9 = arith.constant 0 : index
    %9 = vector.load %arg4[%c0_8, %c0_9] : memref<1x32xf32, #tpu.memory_space<vmem>>, vector<1x32xf32>
    %cst_10 = arith.constant dense<0.000000e+00> : vector<1392x32xf32>
    %10 = tpu.matmul %7, %8, %cst_10 {dimension_numbers = #tpu.dot_dimension_numbers<[1], [0], [0], [1], [0, 0, 1, 1], [], []>} : vector<1392x32xf32>, vector<32x32xf32>, vector<1392x32xf32> -> vector<1392x32xf32>
    %11 = vector.broadcast %9 : vector<1x32xf32> to vector<1392x32xf32>
    %12 = arith.addf %10, %11 : vector<1392x32xf32>
    %cst_11 = arith.constant 0.000000e+00 : f32
    %13 = vector.broadcast %cst_11 : f32 to vector<1392x32xf32>
    %14 = arith.maximumf %12, %13 : vector<1392x32xf32>
    %c0_12 = arith.constant 0 : index
    %c0_13 = arith.constant 0 : index
    %15 = vector.load %arg5[%c0_12, %c0_13] : memref<6x1392xf32, #tpu.memory_space<vmem>>, vector<6x1392xf32>
    %cst_14 = arith.constant dense<0.000000e+00> : vector<6x32xf32>
    %16 = tpu.matmul %15, %14, %cst_14 {dimension_numbers = #tpu.dot_dimension_numbers<[1], [0], [0], [1], [0, 0, 1, 1], [], []>} : vector<6x1392xf32>, vector<1392x32xf32>, vector<6x32xf32> -> vector<6x32xf32>
    %c0_15 = arith.constant 0 : index
    %c0_16 = arith.constant 0 : index
    %17 = vector.load %arg6[%c0_15, %c0_16] : memref<32x8xf32, #tpu.memory_space<vmem>>, vector<32x8xf32>
    %cst_17 = arith.constant dense<0.000000e+00> : vector<6x8xf32>
    %18 = tpu.matmul %16, %17, %cst_17 {dimension_numbers = #tpu.dot_dimension_numbers<[1], [0], [0], [1], [0, 0, 1, 1], [], []>} : vector<6x32xf32>, vector<32x8xf32>, vector<6x8xf32> -> vector<6x8xf32>
    %c0_18 = arith.constant 0 : index
    %c0_19 = arith.constant 0 : index
    %19 = vector.load %arg7[%c0_18, %c0_19] : memref<1x8xf32, #tpu.memory_space<vmem>>, vector<1x8xf32>
    %20 = vector.broadcast %19 : vector<1x8xf32> to vector<6x8xf32>
    %21 = arith.addf %18, %20 : vector<6x8xf32>
    %c0_20 = arith.constant 0 : index
    %c0_21 = arith.constant 0 : index
    %22 = vector.load %arg8[%c0_20, %c0_21] : memref<6x8xf32, #tpu.memory_space<vmem>>, vector<6x8xf32>
    tpu.vector_store %arg8[%c0_20, %c0_21], %21 {strides = array<i32>} : memref<6x8xf32, #tpu.memory_space<vmem>>, vector<6x8xf32>,
    return
  }
}

</mosaic_0001>

<llo_original>
// kernel: tpu_custom_call.1
$region0: #{tpu_custom_call.1}
  #allocation0 [shape = 'u32[]', space=smem, size = 0x4, offset = 0x4, fixed_abs, tag = 'smem constant byte address 0x4 - core index']
  #allocation1 [shape = 'u32[72,128]{1,0:T(1,128)}', space=vmem, size = 0x9000, scoped, tag = 'internal scratch']
  %s0 = inlined_call_operand.vmem [shape: f32[1392,16], index: 0, kind: input, shape index: {}]
  %s1 = inlined_call_operand.vmem [shape: f32[16,32], index: 1, kind: input, shape index: {}]
  %s2 = inlined_call_operand.vmem [shape: f32[1,32], index: 2, kind: input, shape index: {}]
  %s3 = inlined_call_operand.vmem [shape: f32[32,32], index: 3, kind: input, shape index: {}]
  %s4 = inlined_call_operand.vmem [shape: f32[1,32], index: 4, kind: input, shape index: {}]
  %s5 = inlined_call_operand.vmem [shape: f32[6,1392], index: 5, kind: input, shape index: {}]
  %s6 = inlined_call_operand.vmem [shape: f32[32,8], index: 6, kind: input, shape index: {}]
  %s7 = inlined_call_operand.vmem [shape: f32[1,8], index: 7, kind: input, shape index: {}]
  %s8 = inlined_call_operand.hbm [shape: f32[6,8], index: 8, kind: output, shape index: {}]
  %s9 = sld [smem:[#allocation0]]
  $region42: #{tpu_custom_call.1} parent=0
    _
  %s11 = ssub.s32 1, %s9
  %s12 = scalar_select 0, %s11, %s9
  $region1: #{tpu_custom_call.1} parent=0
    #allocation2 [shape = 'u8[4096]{0}', space=vmem, size = 0x1000, scoped, tag = 'output window, operand 0, single buffered']
    #allocation3 [shape = 's32[1]{0}', space=sflag, size = 0x4, scoped, tag = 'scoped memory for tpu_custom_call.1']
    %13 = vsyncpa [#allocation3], 0
    // Predicated region
    $region2: #{tpu_custom_call.1} parent=1 // pred_check
      _
    $region3: #{tpu_custom_call.1} parent=1 // pred_check_branch
      %15 = sbr.rel (0) target = $region5
    $region4: #{tpu_custom_call.1} parent=1 // pred_region
      _
    $region5: #{tpu_custom_call.1} parent=1 // pred_fallthru
      _
    // Predicated region
    $region6: #{tpu_custom_call.1} parent=1 // pred_check
      _
    $region7: #{tpu_custom_call.1} parent=1 // pred_check_branch
      %17 = sbr.rel (0) target = $region9
    $region8: #{tpu_custom_call.1} parent=1 // pred_region
      _
    $region9: #{tpu_custom_call.1} parent=1 // pred_fallthru
      _
    // Predicated region
    $region10: #{tpu_custom_call.1} parent=1 // pred_check
      _
    $region11: #{tpu_custom_call.1} parent=1 // pred_check_branch
      %19 = sbr.rel (0) target = $region13
    $region12: #{tpu_custom_call.1} parent=1 // pred_region
      _
    $region13: #{tpu_custom_call.1} parent=1 // pred_fallthru
      _
    // Predicated region
    $region14: #{tpu_custom_call.1} parent=1 // pred_check
      _
    $region15: #{tpu_custom_call.1} parent=1 // pred_check_branch
      %21 = sbr.rel (0) target = $region17
    $region16: #{tpu_custom_call.1} parent=1 // pred_region
      _
    $region17: #{tpu_custom_call.1} parent=1 // pred_fallthru
      _
    // Predicated region
    $region18: #{tpu_custom_call.1} parent=1 // pred_check
      _
    $region19: #{tpu_custom_call.1} parent=1 // pred_check_branch
      %23 = sbr.rel (0) target = $region21
    $region20: #{tpu_custom_call.1} parent=1 // pred_region
      _
    $region21: #{tpu_custom_call.1} parent=1 // pred_fallthru
      _
    // Predicated region
    $region22: #{tpu_custom_call.1} parent=1 // pred_check
      _
    $region23: #{tpu_custom_call.1} parent=1 // pred_check_branch
      %25 = sbr.rel (0) target = $region25
    $region24: #{tpu_custom_call.1} parent=1 // pred_region
      _
    $region25: #{tpu_custom_call.1} parent=1 // pred_fallthru
      _
    // Predicated region
    $region26: #{tpu_custom_call.1} parent=1 // pred_check
      _
    $region27: #{tpu_custom_call.1} parent=1 // pred_check_branch
      %27 = sbr.rel (0) target = $region29
    $region28: #{tpu_custom_call.1} parent=1 // pred_region
      _
    $region29: #{tpu_custom_call.1} parent=1 // pred_fallthru
      _
    // Predicated region
    $region30: #{tpu_custom_call.1} parent=1 // pred_check
      _
    $region31: #{tpu_custom_call.1} parent=1 // pred_check_branch
      %29 = sbr.rel (0) target = $region33
    $region32: #{tpu_custom_call.1} parent=1 // pred_region
      _
    $region33: #{tpu_custom_call.1} parent=1 // pred_fallthru
      _
    %v30 = vld [vmem:[%s0] sm:$0xff]
    %v31 = vld [vmem:[%s0 + $0x8] sm:$0xff]
    %v32 = vld [vmem:[%s0 + $0x10] sm:$0xff]
    %v33 = vld [vmem:[%s0 + $0x18] sm:$0xff]
    %v34 = vld [vmem:[%s0 + $0x20] sm:$0xff]
    %v35 = vld [vmem:[%s0 + $0x28] sm:$0xff]
    %v36 = vld [vmem:[%s0 + $0x30] sm:$0xff]
    %v37 = vld [vmem:[%s0 + $0x38] sm:$0xff]
    %v38 = vld [vmem:[%s0 + $0x40] sm:$0xff]
    %v39 = vld [vmem:[%s0 + $0x48] sm:$0xff]
    %v40 = vld [vmem:[%s0 + $0x50] sm:$0xff]
    %v41 = vld [vmem:[%s0 + $0x58] sm:$0xff]
    %v42 = vld [vmem:[%s0 + $0x60] sm:$0xff]
    %v43 = vld [vmem:[%s0 + $0x68] sm:$0xff]
    %v44 = vld [vmem:[%s0 + $0x70] sm:$0xff]
    %v45 = vld [vmem:[%s0 + $0x78] sm:$0xff]
    %v46 = vld [vmem:[%s0 + $0x80] sm:$0xff]
    %v47 = vld [vmem:[%s0 + $0x88] sm:$0xff]
    %v48 = vld [vmem:[%s0 + $0x90] sm:$0xff]
    %v49 = vld [vmem:[%s0 + $0x98] sm:$0xff]
    %v50 = vld [vmem:[%s0 + $0xa0] sm:$0xff]
    %v51 = vld [vmem:[%s0 + $0xa8] sm:$0xff]
    %v52 = vld [vmem:[%s0 + $0xb0] sm:$0xff]
    %v53 = vld [vmem:[%s0 + $0xb8] sm:$0xff]
    %v54 = vld [vmem:[%s0 + $0xc0] sm:$0xff]
    %v55 = vld [vmem:[%s0 + $0xc8] sm:$0xff]
    %v56 = vld [vmem:[%s0 + $0xd0] sm:$0xff]
    %v57 = vld [vmem:[%s0 + $0xd8] sm:$0xff]
    %v58 = vld [vmem:[%s0 + $0xe0] sm:$0xff]
    %v59 = vld [vmem:[%s0 + $0xe8] sm:$0xff]
    %v60 = vld [vmem:[%s0 + $0xf0] sm:$0xff]
    %v61 = vld [vmem:[%s0 + $0xf8] sm:$0xff]
    %v62 = vld [vmem:[%s0 + $0x100] sm:$0xff]
    %v63 = vld [vmem:[%s0 + $0x108] sm:$0xff]
    %v64 = vld [vmem:[%s0 + $0x110] sm:$0xff]
    %v65 = vld [vmem:[%s0 + $0x118] sm:$0xff]
    %v66 = vld [vmem:[%s0 + $0x120] sm:$0xff]
    %v67 = vld [vmem:[%s0 + $0x128] sm:$0xff]
    %v68 = vld [vmem:[%s0 + $0x130] sm:$0xff]
    %v69 = vld [vmem:[%s0 + $0x138] sm:$0xff]
    %v70 = vld [vmem:[%s0 + $0x140] sm:$0xff]
    %v71 = vld [vmem:[%s0 + $0x148] sm:$0xff]
    %v72 = vld [vmem:[%s0 + $0x150] sm:$0xff]
    %v73 = vld [vmem:[%s0 + $0x158] sm:$0xff]
    %v74 = vld [vmem:[%s0 + $0x160] sm:$0xff]
    %v75 = vld [vmem:[%s0 + $0x168] sm:$0xff]
    %v76 = vld [vmem:[%s0 + $0x170] sm:$0xff]
    %v77 = vld [vmem:[%s0 + $0x178] sm:$0xff]
    %v78 = vld [vmem:[%s0 + $0x180] sm:$0xff]
    %v79 = vld [vmem:[%s0 + $0x188] sm:$0xff]
    %v80 = vld [vmem:[%s0 + $0x190] sm:$0xff]
    %v81 = vld [vmem:[%s0 + $0x198] sm:$0xff]
    %v82 = vld [vmem:[%s0 + $0x1a0] sm:$0xff]
    %v83 = vld [vmem:[%s0 + $0x1a8] sm:$0xff]
    %v84 = vld [vmem:[%s0 + $0x1b0] sm:$0xff]
    %v85 = vld [vmem:[%s0 + $0x1b8] sm:$0xff]
    %v86 = vld [vmem:[%s0 + $0x1c0] sm:$0xff]
    %v87 = vld [vmem:[%s0 + $0x1c8] sm:$0xff]
    %v88 = vld [vmem:[%s0 + $0x1d0] sm:$0xff]
    %v89 = vld [vmem:[%s0 + $0x1d8] sm:$0xff]
    %v90 = vld [vmem:[%s0 + $0x1e0] sm:$0xff]
    %v91 = vld [vmem:[%s0 + $0x1e8] sm:$0xff]
    %v92 = vld [vmem:[%s0 + $0x1f0] sm:$0xff]
    %v93 = vld [vmem:[%s0 + $0x1f8] sm:$0xff]
    %v94 = vld [vmem:[%s0 + $0x200] sm:$0xff]
    %v95 = vld [vmem:[%s0 + $0x208] sm:$0xff]
    %v96 = vld [vmem:[%s0 + $0x210] sm:$0xff]
    %v97 = vld [vmem:[%s0 + $0x218] sm:$0xff]
    %v98 = vld [vmem:[%s0 + $0x220] sm:$0xff]
    %v99 = vld [vmem:[%s0 + $0x228] sm:$0xff]
    %v100 = vld [vmem:[%s0 + $0x230] sm:$0xff]
    %v101 = vld [vmem:[%s0 + $0x238] sm:$0xff]
    %v102 = vld [vmem:[%s0 + $0x240] sm:$0xff]
    %v103 = vld [vmem:[%s0 + $0x248] sm:$0xff]
    %v104 = vld [vmem:[%s0 + $0x250] sm:$0xff]
    %v105 = vld [vmem:[%s0 + $0x258] sm:$0xff]
    %v106 = vld [vmem:[%s0 + $0x260] sm:$0xff]
    %v107 = vld [vmem:[%s0 + $0x268] sm:$0xff]
    %v108 = vld [vmem:[%s0 + $0x270] sm:$0xff]
    %v109 = vld [vmem:[%s0 + $0x278] sm:$0xff]
    %v110 = vld [vmem:[%s0 + $0x280] sm:$0xff]
    %v111 = vld [vmem:[%s0 + $0x288] sm:$0xff]
    %v112 = vld [vmem:[%s0 + $0x290] sm:$0xff]
    %v113 = vld [vmem:[%s0 + $0x298] sm:$0xff]
    %v114 = vld [vmem:[%s0 + $0x2a0] sm:$0xff]
    %v115 = vld [vmem:[%s0 + $0x2a8] sm:$0xff]
    %v116 = vld [vmem:[%s0 + $0x2b0] sm:$0xff]
    %v117 = vld [vmem:[%s0 + $0x2b8] sm:$0xff]
    %v118 = vld [vmem:[%s0 + $0x2c0] sm:$0xff]
    %v119 = vld [vmem:[%s0 + $0x2c8] sm:$0xff]
    %v120 = vld [vmem:[%s0 + $0x2d0] sm:$0xff]
    %v121 = vld [vmem:[%s0 + $0x2d8] sm:$0xff]
    %v122 = vld [vmem:[%s0 + $0x2e0] sm:$0xff]
    %v123 = vld [vmem:[%s0 + $0x2e8] sm:$0xff]
    %v124 = vld [vmem:[%s0 + $0x2f0] sm:$0xff]
    %v125 = vld [vmem:[%s0 + $0x2f8] sm:$0xff]
    %v126 = vld [vmem:[%s0 + $0x300] sm:$0xff]
    %v127 = vld [vmem:[%s0 + $0x308] sm:$0xff]
    %v128 = vld [vmem:[%s0 + $0x310] sm:$0xff]
    %v129 = vld [vmem:[%s0 + $0x318] sm:$0xff]
    %v130 = vld [vmem:[%s0 + $0x320] sm:$0xff]
    %v131 = vld [vmem:[%s0 + $0x328] sm:$0xff]
    %v132 = vld [vmem:[%s0 + $0x330] sm:$0xff]
    %v133 = vld [vmem:[%s0 + $0x338] sm:$0xff]
    %v134 = vld [vmem:[%s0 + $0x340] sm:$0xff]
    %v135 = vld [vmem:[%s0 + $0x348] sm:$0xff]
    %v136 = vld [vmem:[%s0 + $0x350] sm:$0xff]
    %v137 = vld [vmem:[%s0 + $0x358] sm:$0xff]
    %v138 = vld [vmem:[%s0 + $0x360] sm:$0xff]
    %v139 = vld [vmem:[%s0 + $0x368] sm:$0xff]
    %v140 = vld [vmem:[%s0 + $0x370] sm:$0xff]
    %v141 = vld [vmem:[%s0 + $0x378] sm:$0xff]
    %v142 = vld [vmem:[%s0 + $0x380] sm:$0xff]
    %v143 = vld [vmem:[%s0 + $0x388] sm:$0xff]
    %v144 = vld [vmem:[%s0 + $0x390] sm:$0xff]
    %v145 = vld [vmem:[%s0 + $0x398] sm:$0xff]
    %v146 = vld [vmem:[%s0 + $0x3a0] sm:$0xff]
    %v147 = vld [vmem:[%s0 + $0x3a8] sm:$0xff]
    %v148 = vld [vmem:[%s0 + $0x3b0] sm:$0xff]
    %v149 = vld [vmem:[%s0 + $0x3b8] sm:$0xff]
    %v150 = vld [vmem:[%s0 + $0x3c0] sm:$0xff]
    %v151 = vld [vmem:[%s0 + $0x3c8] sm:$0xff]
    %v152 = vld [vmem:[%s0 + $0x3d0] sm:$0xff]
    %v153 = vld [vmem:[%s0 + $0x3d8] sm:$0xff]
    %v154 = vld [vmem:[%s0 + $0x3e0] sm:$0xff]
    %v155 = vld [vmem:[%s0 + $0x3e8] sm:$0xff]
    %v156 = vld [vmem:[%s0 + $0x3f0] sm:$0xff]
    %v157 = vld [vmem:[%s0 + $0x3f8] sm:$0xff]
    %v158 = vld [vmem:[%s0 + $0x400] sm:$0xff]
    %v159 = vld [vmem:[%s0 + $0x408] sm:$0xff]
    %v160 = vld [vmem:[%s0 + $0x410] sm:$0xff]
    %v161 = vld [vmem:[%s0 + $0x418] sm:$0xff]
    %v162 = vld [vmem:[%s0 + $0x420] sm:$0xff]
    %v163 = vld [vmem:[%s0 + $0x428] sm:$0xff]
    %v164 = vld [vmem:[%s0 + $0x430] sm:$0xff]
    %v165 = vld [vmem:[%s0 + $0x438] sm:$0xff]
    %v166 = vld [vmem:[%s0 + $0x440] sm:$0xff]
    %v167 = vld [vmem:[%s0 + $0x448] sm:$0xff]
    %v168 = vld [vmem:[%s0 + $0x450] sm:$0xff]
    %v169 = vld [vmem:[%s0 + $0x458] sm:$0xff]
    %v170 = vld [vmem:[%s0 + $0x460] sm:$0xff]
    %v171 = vld [vmem:[%s0 + $0x468] sm:$0xff]
    %v172 = vld [vmem:[%s0 + $0x470] sm:$0xff]
    %v173 = vld [vmem:[%s0 + $0x478] sm:$0xff]
    %v174 = vld [vmem:[%s0 + $0x480] sm:$0xff]
    %v175 = vld [vmem:[%s0 + $0x488] sm:$0xff]
    %v176 = vld [vmem:[%s0 + $0x490] sm:$0xff]
    %v177 = vld [vmem:[%s0 + $0x498] sm:$0xff]
    %v178 = vld [vmem:[%s0 + $0x4a0] sm:$0xff]
    %v179 = vld [vmem:[%s0 + $0x4a8] sm:$0xff]
    %v180 = vld [vmem:[%s0 + $0x4b0] sm:$0xff]
    %v181 = vld [vmem:[%s0 + $0x4b8] sm:$0xff]
    %v182 = vld [vmem:[%s0 + $0x4c0] sm:$0xff]
    %v183 = vld [vmem:[%s0 + $0x4c8] sm:$0xff]
    %v184 = vld [vmem:[%s0 + $0x4d0] sm:$0xff]
    %v185 = vld [vmem:[%s0 + $0x4d8] sm:$0xff]
    %v186 = vld [vmem:[%s0 + $0x4e0] sm:$0xff]
    %v187 = vld [vmem:[%s0 + $0x4e8] sm:$0xff]
    %v188 = vld [vmem:[%s0 + $0x4f0] sm:$0xff]
    %v189 = vld [vmem:[%s0 + $0x4f8] sm:$0xff]
    %v190 = vld [vmem:[%s0 + $0x500] sm:$0xff]
    %v191 = vld [vmem:[%s0 + $0x508] sm:$0xff]
    %v192 = vld [vmem:[%s0 + $0x510] sm:$0xff]
    %v193 = vld [vmem:[%s0 + $0x518] sm:$0xff]
    %v194 = vld [vmem:[%s0 + $0x520] sm:$0xff]
    %v195 = vld [vmem:[%s0 + $0x528] sm:$0xff]
    %v196 = vld [vmem:[%s0 + $0x530] sm:$0xff]
    %v197 = vld [vmem:[%s0 + $0x538] sm:$0xff]
    %v198 = vld [vmem:[%s0 + $0x540] sm:$0xff]
    %v199 = vld [vmem:[%s0 + $0x548] sm:$0xff]
    %v200 = vld [vmem:[%s0 + $0x550] sm:$0xff]
    %v201 = vld [vmem:[%s0 + $0x558] sm:$0xff]
    %v202 = vld [vmem:[%s0 + $0x560] sm:$0xff]
    %v203 = vld [vmem:[%s0 + $0x568] sm:$0xff]
    %v204 = vld [vmem:[%s1] sm:$0xff]
    %v205 = vld [vmem:[%s1 + $0x8] sm:$0xff]
    %v206 = vld [vmem:[%s2] sm:$0x1]
    %v208 = vperm.slane %v206, 0
    %vm210 = vcmask 130048
    %v212 = vsel %vm210, %v30, 0
    %v215 = vsel %vm210, %v31, 0
    %v218 = vsel %vm210, %v32, 0
    %v221 = vsel %vm210, %v33, 0
    %v224 = vsel %vm210, %v34, 0
    %v227 = vsel %vm210, %v35, 0
    %v230 = vsel %vm210, %v36, 0
    %v233 = vsel %vm210, %v37, 0
    %v236 = vsel %vm210, %v38, 0
    %v239 = vsel %vm210, %v39, 0
    %v242 = vsel %vm210, %v40, 0
    %v245 = vsel %vm210, %v41, 0
    %v248 = vsel %vm210, %v42, 0
    %v251 = vsel %vm210, %v43, 0
    %v254 = vsel %vm210, %v44, 0
    %v257 = vsel %vm210, %v45, 0
    %v260 = vsel %vm210, %v46, 0
    %v263 = vsel %vm210, %v47, 0
    %v266 = vsel %vm210, %v48, 0
    %v269 = vsel %vm210, %v49, 0
    %v272 = vsel %vm210, %v50, 0
    %v275 = vsel %vm210, %v51, 0
    %v278 = vsel %vm210, %v52, 0
    %v281 = vsel %vm210, %v53, 0
    %v284 = vsel %vm210, %v54, 0
    %v287 = vsel %vm210, %v55, 0
    %v290 = vsel %vm210, %v56, 0
    %v293 = vsel %vm210, %v57, 0
    %v296 = vsel %vm210, %v58, 0
    %v299 = vsel %vm210, %v59, 0
    %v302 = vsel %vm210, %v60, 0
    %v305 = vsel %vm210, %v61, 0
    %v308 = vsel %vm210, %v62, 0
    %v311 = vsel %vm210, %v63, 0
    %v314 = vsel %vm210, %v64, 0
    %v317 = vsel %vm210, %v65, 0
    %v320 = vsel %vm210, %v66, 0
    %v323 = vsel %vm210, %v67, 0
    %v326 = vsel %vm210, %v68, 0
    %v329 = vsel %vm210, %v69, 0
    %v332 = vsel %vm210, %v70, 0
    %v335 = vsel %vm210, %v71, 0
    %v338 = vsel %vm210, %v72, 0
    %v341 = vsel %vm210, %v73, 0
    %v344 = vsel %vm210, %v74, 0
    %v347 = vsel %vm210, %v75, 0
    %v350 = vsel %vm210, %v76, 0
    %v353 = vsel %vm210, %v77, 0
    %v356 = vsel %vm210, %v78, 0
    %v359 = vsel %vm210, %v79, 0
    %v362 = vsel %vm210, %v80, 0
    %v365 = vsel %vm210, %v81, 0
    %v368 = vsel %vm210, %v82, 0
    %v371 = vsel %vm210, %v83, 0
    %v374 = vsel %vm210, %v84, 0
    %v377 = vsel %vm210, %v85, 0
    %v380 = vsel %vm210, %v86, 0
    %v383 = vsel %vm210, %v87, 0
    %v386 = vsel %vm210, %v88, 0
    %v389 = vsel %vm210, %v89, 0
    %v392 = vsel %vm210, %v90, 0
    %v395 = vsel %vm210, %v91, 0
    %v398 = vsel %vm210, %v92, 0
    %v401 = vsel %vm210, %v93, 0
    %v404 = vsel %vm210, %v94, 0
    %v407 = vsel %vm210, %v95, 0
    %v410 = vsel %vm210, %v96, 0
    %v413 = vsel %vm210, %v97, 0
    %v416 = vsel %vm210, %v98, 0
    %v419 = vsel %vm210, %v99, 0
    %v422 = vsel %vm210, %v100, 0
    %v425 = vsel %vm210, %v101, 0
    %v428 = vsel %vm210, %v102, 0
    %v431 = vsel %vm210, %v103, 0
    %v434 = vsel %vm210, %v104, 0
    %v437 = vsel %vm210, %v105, 0
    %v440 = vsel %vm210, %v106, 0
    %v443 = vsel %vm210, %v107, 0
    %v446 = vsel %vm210, %v108, 0
    %v449 = vsel %vm210, %v109, 0
    %v452 = vsel %vm210, %v110, 0
    %v455 = vsel %vm210, %v111, 0
    %v458 = vsel %vm210, %v112, 0
    %v461 = vsel %vm210, %v113, 0
    %v464 = vsel %vm210, %v114, 0
    %v467 = vsel %vm210, %v115, 0
    %v470 = vsel %vm210, %v116, 0
    %v473 = vsel %vm210, %v117, 0
    %v476 = vsel %vm210, %v118, 0
    %v479 = vsel %vm210, %v119, 0
    %v482 = vsel %vm210, %v120, 0
    %v485 = vsel %vm210, %v121, 0
    %v488 = vsel %vm210, %v122, 0
    %v491 = vsel %vm210, %v123, 0
    %v494 = vsel %vm210, %v124, 0
    %v497 = vsel %vm210, %v125, 0
    %v500 = vsel %vm210, %v126, 0
    %v503 = vsel %vm210, %v127, 0
    %v506 = vsel %vm210, %v128, 0
    %v509 = vsel %vm210, %v129, 0
    %v512 = vsel %vm210, %v130, 0
    %v515 = vsel %vm210, %v131, 0
    %v518 = vsel %vm210, %v132, 0
    %v521 = vsel %vm210, %v133, 0
    %v524 = vsel %vm210, %v134, 0
    %v527 = vsel %vm210, %v135, 0
    %v530 = vsel %vm210, %v136, 0
    %v533 = vsel %vm210, %v137, 0
    %v536 = vsel %vm210, %v138, 0
    %v539 = vsel %vm210, %v139, 0
    %v542 = vsel %vm210, %v140, 0
    %v545 = vsel %vm210, %v141, 0
    %v548 = vsel %vm210, %v142, 0
    %v551 = vsel %vm210, %v143, 0
    %v554 = vsel %vm210, %v144, 0
    %v557 = vsel %vm210, %v145, 0
    %v560 = vsel %vm210, %v146, 0
    %v563 = vsel %vm210, %v147, 0
    %v566 = vsel %vm210, %v148, 0
    %v569 = vsel %vm210, %v149, 0
    %v572 = vsel %vm210, %v150, 0
    %v575 = vsel %vm210, %v151, 0
    %v578 = vsel %vm210, %v152, 0
    %v581 = vsel %vm210, %v153, 0
    %v584 = vsel %vm210, %v154, 0
    %v587 = vsel %vm210, %v155, 0
    %v590 = vsel %vm210, %v156, 0
    %v593 = vsel %vm210, %v157, 0
    %v596 = vsel %vm210, %v158, 0
    %v599 = vsel %vm210, %v159, 0
    %v602 = vsel %vm210, %v160, 0
    %v605 = vsel %vm210, %v161, 0
    %v608 = vsel %vm210, %v162, 0
    %v611 = vsel %vm210, %v163, 0
    %v614 = vsel %vm210, %v164, 0
    %v617 = vsel %vm210, %v165, 0
    %v620 = vsel %vm210, %v166, 0
    %v623 = vsel %vm210, %v167, 0
    %v626 = vsel %vm210, %v168, 0
    %v629 = vsel %vm210, %v169, 0
    %v632 = vsel %vm210, %v170, 0
    %v635 = vsel %vm210, %v171, 0
    %v638 = vsel %vm210, %v172, 0
    %v641 = vsel %vm210, %v173, 0
    %v644 = vsel %vm210, %v174, 0
    %v647 = vsel %vm210, %v175, 0
    %v650 = vsel %vm210, %v176, 0
    %v653 = vsel %vm210, %v177, 0
    %v656 = vsel %vm210, %v178, 0
    %v659 = vsel %vm210, %v179, 0
    %v662 = vsel %vm210, %v180, 0
    %v665 = vsel %vm210, %v181, 0
    %v668 = vsel %vm210, %v182, 0
    %v671 = vsel %vm210, %v183, 0
    %v674 = vsel %vm210, %v184, 0
    %v677 = vsel %vm210, %v185, 0
    %v680 = vsel %vm210, %v186, 0
    %v683 = vsel %vm210, %v187, 0
    %v686 = vsel %vm210, %v188, 0
    %v689 = vsel %vm210, %v189, 0
    %v692 = vsel %vm210, %v190, 0
    %v695 = vsel %vm210, %v191, 0
    %v698 = vsel %vm210, %v192, 0
    %v701 = vsel %vm210, %v193, 0
    %v704 = vsel %vm210, %v194, 0
    %v707 = vsel %vm210, %v195, 0
    %v710 = vsel %vm210, %v196, 0
    %v713 = vsel %vm210, %v197, 0
    %v716 = vsel %vm210, %v198, 0
    %v719 = vsel %vm210, %v199, 0
    %v722 = vsel %vm210, %v200, 0
    %v725 = vsel %vm210, %v201, 0
    %v728 = vsel %vm210, %v202, 0
    %v731 = vsel %vm210, %v203, 0
    %733 = vmatpush.msra.mxu0 0.0
    %734 = vmatpush.msra.mxu0 0.0
    %735 = vmatpush.msra.mxu0 0.0
    %736 = vmatpush.msra.mxu0 0.0
    %737 = vmatpush.msra.mxu0 0.0
    %738 = vmatpush.msra.mxu0 0.0
    %739 = vmatpush.msra.mxu0 0.0
    %740 = vmatpush.msra.mxu0 0.0
    %741 = vmatpush.msra.mxu0 0.0
    %742 = vmatpush.msra.mxu0 0.0
    %743 = vmatpush.msra.mxu0 0.0
    %744 = vmatpush.msra.mxu0 0.0
    %745 = vmatpush.msra.mxu0 0.0
    %746 = vmatpush.msra.mxu0 0.0
    %747 = vmatpush.msra.mxu0 %v205
    %748 = vmatpush.msra.mxu0 %v204
    %749 = vmatmul.f32.gmra.mxu0 %v212
    %v750 = vpop.f32.mrf.mxu0
    %v751 = vadd.f32 %v208, %v750
    %752 = vmatmul.f32.gmra.mxu0 %v215
    %v753 = vpop.f32.mrf.mxu0
    %v754 = vadd.f32 %v208, %v753
    %755 = vmatmul.f32.gmra.mxu0 %v218
    %v756 = vpop.f32.mrf.mxu0
    %v757 = vadd.f32 %v208, %v756
    %758 = vmatmul.f32.gmra.mxu0 %v221
    %v759 = vpop.f32.mrf.mxu0
    %v760 = vadd.f32 %v208, %v759
    %761 = vmatmul.f32.gmra.mxu0 %v224
    %v762 = vpop.f32.mrf.mxu0
    %v763 = vadd.f32 %v208, %v762
    %764 = vmatmul.f32.gmra.mxu0 %v227
    %v765 = vpop.f32.mrf.mxu0
    %v766 = vadd.f32 %v208, %v765
    %767 = vmatmul.f32.gmra.mxu0 %v230
    %v768 = vpop.f32.mrf.mxu0
    %v769 = vadd.f32 %v208, %v768
    %770 = vmatmul.f32.gmra.mxu0 %v233
    %v771 = vpop.f32.mrf.mxu0
    %v772 = vadd.f32 %v208, %v771
    %773 = vmatmul.f32.gmra.mxu0 %v236
    %v774 = vpop.f32.mrf.mxu0
    %v775 = vadd.f32 %v208, %v774
    %776 = vmatmul.f32.gmra.mxu0 %v239
    %v777 = vpop.f32.mrf.mxu0
    %v778 = vadd.f32 %v208, %v777
    %779 = vmatmul.f32.gmra.mxu0 %v242
    %v780 = vpop.f32.mrf.mxu0
    %v781 = vadd.f32 %v208, %v780
    %782 = vmatmul.f32.gmra.mxu0 %v245
    %v783 = vpop.f32.mrf.mxu0
    %v784 = vadd.f32 %v208, %v783
    %785 = vmatmul.f32.gmra.mxu0 %v248
    %v786 = vpop.f32.mrf.mxu0
    %v787 = vadd.f32 %v208, %v786
    %788 = vmatmul.f32.gmra.mxu0 %v251
    %v789 = vpop.f32.mrf.mxu0
    %v790 = vadd.f32 %v208, %v789
    %791 = vmatmul.f32.gmra.mxu0 %v254
    %v792 = vpop.f32.mrf.mxu0
    %v793 = vadd.f32 %v208, %v792
    %794 = vmatmul.f32.gmra.mxu0 %v257
    %v795 = vpop.f32.mrf.mxu0
    %v796 = vadd.f32 %v208, %v795
    %797 = vmatmul.f32.gmra.mxu0 %v260
    %v798 = vpop.f32.mrf.mxu0
    %v799 = vadd.f32 %v208, %v798
    %800 = vmatmul.f32.gmra.mxu0 %v263
    %v801 = vpop.f32.mrf.mxu0
    %v802 = vadd.f32 %v208, %v801
    %803 = vmatmul.f32.gmra.mxu0 %v266
    %v804 = vpop.f32.mrf.mxu0
    %v805 = vadd.f32 %v208, %v804
    %806 = vmatmul.f32.gmra.mxu0 %v269
    %v807 = vpop.f32.mrf.mxu0
    %v808 = vadd.f32 %v208, %v807
    %809 = vmatmul.f32.gmra.mxu0 %v272
    %v810 = vpop.f32.mrf.mxu0
    %v811 = vadd.f32 %v208, %v810
    %812 = vmatmul.f32.gmra.mxu0 %v275
    %v813 = vpop.f32.mrf.mxu0
    %v814 = vadd.f32 %v208, %v813
    %815 = vmatmul.f32.gmra.mxu0 %v278
    %v816 = vpop.f32.mrf.mxu0
    %v817 = vadd.f32 %v208, %v816
    %818 = vmatmul.f32.gmra.mxu0 %v281
    %v819 = vpop.f32.mrf.mxu0
    %v820 = vadd.f32 %v208, %v819
    %821 = vmatmul.f32.gmra.mxu0 %v284
    %v822 = vpop.f32.mrf.mxu0
    %v823 = vadd.f32 %v208, %v822
    %824 = vmatmul.f32.gmra.mxu0 %v287
    %v825 = vpop.f32.mrf.mxu0
    %v826 = vadd.f32 %v208, %v825
    %827 = vmatmul.f32.gmra.mxu0 %v290
    %v828 = vpop.f32.mrf.mxu0
    %v829 = vadd.f32 %v208, %v828
    %830 = vmatmul.f32.gmra.mxu0 %v293
    %v831 = vpop.f32.mrf.mxu0
    %v832 = vadd.f32 %v208, %v831
    %833 = vmatmul.f32.gmra.mxu0 %v296
    %v834 = vpop.f32.mrf.mxu0
    %v835 = vadd.f32 %v208, %v834
    %836 = vmatmul.f32.gmra.mxu0 %v299
    %v837 = vpop.f32.mrf.mxu0
    %v838 = vadd.f32 %v208, %v837
    %839 = vmatmul.f32.gmra.mxu0 %v302
    %v840 = vpop.f32.mrf.mxu0
    %v841 = vadd.f32 %v208, %v840
    %842 = vmatmul.f32.gmra.mxu0 %v305
    %v843 = vpop.f32.mrf.mxu0
    %v844 = vadd.f32 %v208, %v843
    %845 = vmatmul.f32.gmra.mxu0 %v308
    %v846 = vpop.f32.mrf.mxu0
    %v847 = vadd.f32 %v208, %v846
    %848 = vmatmul.f32.gmra.mxu0 %v311
    %v849 = vpop.f32.mrf.mxu0
    %v850 = vadd.f32 %v208, %v849
    %851 = vmatmul.f32.gmra.mxu0 %v314
    %v852 = vpop.f32.mrf.mxu0
    %v853 = vadd.f32 %v208, %v852
    %854 = vmatmul.f32.gmra.mxu0 %v317
    %v855 = vpop.f32.mrf.mxu0
    %v856 = vadd.f32 %v208, %v855
    %857 = vmatmul.f32.gmra.mxu0 %v320
    %v858 = vpop.f32.mrf.mxu0
    %v859 = vadd.f32 %v208, %v858
    %860 = vmatmul.f32.gmra.mxu0 %v323
    %v861 = vpop.f32.mrf.mxu0
    %v862 = vadd.f32 %v208, %v861
    %863 = vmatmul.f32.gmra.mxu0 %v326
    %v864 = vpop.f32.mrf.mxu0
    %v865 = vadd.f32 %v208, %v864
    %866 = vmatmul.f32.gmra.mxu0 %v329
    %v867 = vpop.f32.mrf.mxu0
    %v868 = vadd.f32 %v208, %v867
    %869 = vmatmul.f32.gmra.mxu0 %v332
    %v870 = vpop.f32.mrf.mxu0
    %v871 = vadd.f32 %v208, %v870
    %872 = vmatmul.f32.gmra.mxu0 %v335
    %v873 = vpop.f32.mrf.mxu0
    %v874 = vadd.f32 %v208, %v873
    %875 = vmatmul.f32.gmra.mxu0 %v338
    %v876 = vpop.f32.mrf.mxu0
    %v877 = vadd.f32 %v208, %v876
    %878 = vmatmul.f32.gmra.mxu0 %v341
    %v879 = vpop.f32.mrf.mxu0
    %v880 = vadd.f32 %v208, %v879
    %881 = vmatmul.f32.gmra.mxu0 %v344
    %v882 = vpop.f32.mrf.mxu0
    %v883 = vadd.f32 %v208, %v882
    %884 = vmatmul.f32.gmra.mxu0 %v347
    %v885 = vpop.f32.mrf.mxu0
    %v886 = vadd.f32 %v208, %v885
    %887 = vmatmul.f32.gmra.mxu0 %v350
    %v888 = vpop.f32.mrf.mxu0
    %v889 = vadd.f32 %v208, %v888
    %890 = vmatmul.f32.gmra.mxu0 %v353
    %v891 = vpop.f32.mrf.mxu0
    %v892 = vadd.f32 %v208, %v891
    %893 = vmatmul.f32.gmra.mxu0 %v356
    %v894 = vpop.f32.mrf.mxu0
    %v895 = vadd.f32 %v208, %v894
    %896 = vmatmul.f32.gmra.mxu0 %v359
    %v897 = vpop.f32.mrf.mxu0
    %v898 = vadd.f32 %v208, %v897
    %899 = vmatmul.f32.gmra.mxu0 %v362
    %v900 = vpop.f32.mrf.mxu0
    %v901 = vadd.f32 %v208, %v900
    %902 = vmatmul.f32.gmra.mxu0 %v365
    %v903 = vpop.f32.mrf.mxu0
    %v904 = vadd.f32 %v208, %v903
    %905 = vmatmul.f32.gmra.mxu0 %v368
    %v906 = vpop.f32.mrf.mxu0
    %v907 = vadd.f32 %v208, %v906
    %908 = vmatmul.f32.gmra.mxu0 %v371
    %v909 = vpop.f32.mrf.mxu0
    %v910 = vadd.f32 %v208, %v909
    %911 = vmatmul.f32.gmra.mxu0 %v374
    %v912 = vpop.f32.mrf.mxu0
    %v913 = vadd.f32 %v208, %v912
    %914 = vmatmul.f32.gmra.mxu0 %v377
    %v915 = vpop.f32.mrf.mxu0
    %v916 = vadd.f32 %v208, %v915
    %917 = vmatmul.f32.gmra.mxu0 %v380
    %v918 = vpop.f32.mrf.mxu0
    %v919 = vadd.f32 %v208, %v918
    %920 = vmatmul.f32.gmra.mxu0 %v383
    %v921 = vpop.f32.mrf.mxu0
    %v922 = vadd.f32 %v208, %v921
    %923 = vmatmul.f32.gmra.mxu0 %v386
    %v924 = vpop.f32.mrf.mxu0
    %v925 = vadd.f32 %v208, %v924
    %926 = vmatmul.f32.gmra.mxu0 %v389
    %v927 = vpop.f32.mrf.mxu0
    %v928 = vadd.f32 %v208, %v927
    %929 = vmatmul.f32.gmra.mxu0 %v392
    %v930 = vpop.f32.mrf.mxu0
    %v931 = vadd.f32 %v208, %v930
    %932 = vmatmul.f32.gmra.mxu0 %v395
    %v933 = vpop.f32.mrf.mxu0
    %v934 = vadd.f32 %v208, %v933
    %935 = vmatmul.f32.gmra.mxu0 %v398
    %v936 = vpop.f32.mrf.mxu0
    %v937 = vadd.f32 %v208, %v936
    %938 = vmatmul.f32.gmra.mxu0 %v401
    %v939 = vpop.f32.mrf.mxu0
    %v940 = vadd.f32 %v208, %v939
    %941 = vmatmul.f32.gmra.mxu0 %v404
    %v942 = vpop.f32.mrf.mxu0
    %v943 = vadd.f32 %v208, %v942
    %944 = vmatmul.f32.gmra.mxu0 %v407
    %v945 = vpop.f32.mrf.mxu0
    %v946 = vadd.f32 %v208, %v945
    %947 = vmatmul.f32.gmra.mxu0 %v410
    %v948 = vpop.f32.mrf.mxu0
    %v949 = vadd.f32 %v208, %v948
    %950 = vmatmul.f32.gmra.mxu0 %v413
    %v951 = vpop.f32.mrf.mxu0
    %v952 = vadd.f32 %v208, %v951
    %953 = vmatmul.f32.gmra.mxu0 %v416
    %v954 = vpop.f32.mrf.mxu0
    %v955 = vadd.f32 %v208, %v954
    %956 = vmatmul.f32.gmra.mxu0 %v419
    %v957 = vpop.f32.mrf.mxu0
    %v958 = vadd.f32 %v208, %v957
    %959 = vmatmul.f32.gmra.mxu0 %v422
    %v960 = vpop.f32.mrf.mxu0
    %v961 = vadd.f32 %v208, %v960
    %962 = vmatmul.f32.gmra.mxu0 %v425
    %v963 = vpop.f32.mrf.mxu0
    %v964 = vadd.f32 %v208, %v963
    %965 = vmatmul.f32.gmra.mxu0 %v428
    %v966 = vpop.f32.mrf.mxu0
    %v967 = vadd.f32 %v208, %v966
    %968 = vmatmul.f32.gmra.mxu0 %v431
    %v969 = vpop.f32.mrf.mxu0
    %v970 = vadd.f32 %v208, %v969
    %971 = vmatmul.f32.gmra.mxu0 %v434
    %v972 = vpop.f32.mrf.mxu0
    %v973 = vadd.f32 %v208, %v972
    %974 = vmatmul.f32.gmra.mxu0 %v437
    %v975 = vpop.f32.mrf.mxu0
    %v976 = vadd.f32 %v208, %v975
    %977 = vmatmul.f32.gmra.mxu0 %v440
    %v978 = vpop.f32.mrf.mxu0
    %v979 = vadd.f32 %v208, %v978
    %980 = vmatmul.f32.gmra.mxu0 %v443
    %v981 = vpop.f32.mrf.mxu0
    %v982 = vadd.f32 %v208, %v981
    %983 = vmatmul.f32.gmra.mxu0 %v446
    %v984 = vpop.f32.mrf.mxu0
    %v985 = vadd.f32 %v208, %v984
    %986 = vmatmul.f32.gmra.mxu0 %v449
    %v987 = vpop.f32.mrf.mxu0
    %v988 = vadd.f32 %v208, %v987
    %989 = vmatmul.f32.gmra.mxu0 %v452
    %v990 = vpop.f32.mrf.mxu0
    %v991 = vadd.f32 %v208, %v990
    %992 = vmatmul.f32.gmra.mxu0 %v455
    %v993 = vpop.f32.mrf.mxu0
    %v994 = vadd.f32 %v208, %v993
    %995 = vmatmul.f32.gmra.mxu0 %v458
    %v996 = vpop.f32.mrf.mxu0
    %v997 = vadd.f32 %v208, %v996
    %998 = vmatmul.f32.gmra.mxu0 %v461
    %v999 = vpop.f32.mrf.mxu0
    %v1000 = vadd.f32 %v208, %v999
    %1001 = vmatmul.f32.gmra.mxu0 %v464
    %v1002 = vpop.f32.mrf.mxu0
    %v1003 = vadd.f32 %v208, %v1002
    %1004 = vmatmul.f32.gmra.mxu0 %v467
    %v1005 = vpop.f32.mrf.mxu0
    %v1006 = vadd.f32 %v208, %v1005
    %1007 = vmatmul.f32.gmra.mxu0 %v470
    %v1008 = vpop.f32.mrf.mxu0
    %v1009 = vadd.f32 %v208, %v1008
    %1010 = vmatmul.f32.gmra.mxu0 %v473
    %v1011 = vpop.f32.mrf.mxu0
    %v1012 = vadd.f32 %v208, %v1011
    %1013 = vmatmul.f32.gmra.mxu0 %v476
    %v1014 = vpop.f32.mrf.mxu0
    %v1015 = vadd.f32 %v208, %v1014
    %1016 = vmatmul.f32.gmra.mxu0 %v479
    %v1017 = vpop.f32.mrf.mxu0
    %v1018 = vadd.f32 %v208, %v1017
    %1019 = vmatmul.f32.gmra.mxu0 %v482
    %v1020 = vpop.f32.mrf.mxu0
    %v1021 = vadd.f32 %v208, %v1020
    %1022 = vmatmul.f32.gmra.mxu0 %v485
    %v1023 = vpop.f32.mrf.mxu0
    %v1024 = vadd.f32 %v208, %v1023
    %1025 = vmatmul.f32.gmra.mxu0 %v488
    %v1026 = vpop.f32.mrf.mxu0
    %v1027 = vadd.f32 %v208, %v1026
    %1028 = vmatmul.f32.gmra.mxu0 %v491
    %v1029 = vpop.f32.mrf.mxu0
    %v1030 = vadd.f32 %v208, %v1029
    %1031 = vmatmul.f32.gmra.mxu0 %v494
    %v1032 = vpop.f32.mrf.mxu0
    %v1033 = vadd.f32 %v208, %v1032
    %1034 = vmatmul.f32.gmra.mxu0 %v497
    %v1035 = vpop.f32.mrf.mxu0
    %v1036 = vadd.f32 %v208, %v1035
    %1037 = vmatmul.f32.gmra.mxu0 %v500
    %v1038 = vpop.f32.mrf.mxu0
    %v1039 = vadd.f32 %v208, %v1038
    %1040 = vmatmul.f32.gmra.mxu0 %v503
    %v1041 = vpop.f32.mrf.mxu0
    %v1042 = vadd.f32 %v208, %v1041
    %1043 = vmatmul.f32.gmra.mxu0 %v506
    %v1044 = vpop.f32.mrf.mxu0
    %v1045 = vadd.f32 %v208, %v1044
    %1046 = vmatmul.f32.gmra.mxu0 %v509
    %v1047 = vpop.f32.mrf.mxu0
    %v1048 = vadd.f32 %v208, %v1047
    %1049 = vmatmul.f32.gmra.mxu0 %v512
    %v1050 = vpop.f32.mrf.mxu0
    %v1051 = vadd.f32 %v208, %v1050
    %1052 = vmatmul.f32.gmra.mxu0 %v515
    %v1053 = vpop.f32.mrf.mxu0
    %v1054 = vadd.f32 %v208, %v1053
    %1055 = vmatmul.f32.gmra.mxu0 %v518
    %v1056 = vpop.f32.mrf.mxu0
    %v1057 = vadd.f32 %v208, %v1056
    %1058 = vmatmul.f32.gmra.mxu0 %v521
    %v1059 = vpop.f32.mrf.mxu0
    %v1060 = vadd.f32 %v208, %v1059
    %1061 = vmatmul.f32.gmra.mxu0 %v524
    %v1062 = vpop.f32.mrf.mxu0
    %v1063 = vadd.f32 %v208, %v1062
    %1064 = vmatmul.f32.gmra.mxu0 %v527
    %v1065 = vpop.f32.mrf.mxu0
    %v1066 = vadd.f32 %v208, %v1065
    %1067 = vmatmul.f32.gmra.mxu0 %v530
    %v1068 = vpop.f32.mrf.mxu0
    %v1069 = vadd.f32 %v208, %v1068
    %1070 = vmatmul.f32.gmra.mxu0 %v533
    %v1071 = vpop.f32.mrf.mxu0
    %v1072 = vadd.f32 %v208, %v1071
    %1073 = vmatmul.f32.gmra.mxu0 %v536
    %v1074 = vpop.f32.mrf.mxu0
    %v1075 = vadd.f32 %v208, %v1074
    %1076 = vmatmul.f32.gmra.mxu0 %v539
    %v1077 = vpop.f32.mrf.mxu0
    %v1078 = vadd.f32 %v208, %v1077
    %1079 = vmatmul.f32.gmra.mxu0 %v542
    %v1080 = vpop.f32.mrf.mxu0
    %v1081 = vadd.f32 %v208, %v1080
    %1082 = vmatmul.f32.gmra.mxu0 %v545
    %v1083 = vpop.f32.mrf.mxu0
    %v1084 = vadd.f32 %v208, %v1083
    %1085 = vmatmul.f32.gmra.mxu0 %v548
    %v1086 = vpop.f32.mrf.mxu0
    %v1087 = vadd.f32 %v208, %v1086
    %1088 = vmatmul.f32.gmra.mxu0 %v551
    %v1089 = vpop.f32.mrf.mxu0
    %v1090 = vadd.f32 %v208, %v1089
    %1091 = vmatmul.f32.gmra.mxu0 %v554
    %v1092 = vpop.f32.mrf.mxu0
    %v1093 = vadd.f32 %v208, %v1092
    %1094 = vmatmul.f32.gmra.mxu0 %v557
    %v1095 = vpop.f32.mrf.mxu0
    %v1096 = vadd.f32 %v208, %v1095
    %1097 = vmatmul.f32.gmra.mxu0 %v560
    %v1098 = vpop.f32.mrf.mxu0
    %v1099 = vadd.f32 %v208, %v1098
    %1100 = vmatmul.f32.gmra.mxu0 %v563
    %v1101 = vpop.f32.mrf.mxu0
    %v1102 = vadd.f32 %v208, %v1101
    %1103 = vmatmul.f32.gmra.mxu0 %v566
    %v1104 = vpop.f32.mrf.mxu0
    %v1105 = vadd.f32 %v208, %v1104
    %1106 = vmatmul.f32.gmra.mxu0 %v569
    %v1107 = vpop.f32.mrf.mxu0
    %v1108 = vadd.f32 %v208, %v1107
    %1109 = vmatmul.f32.gmra.mxu0 %v572
    %v1110 = vpop.f32.mrf.mxu0
    %v1111 = vadd.f32 %v208, %v1110
    %1112 = vmatmul.f32.gmra.mxu0 %v575
    %v1113 = vpop.f32.mrf.mxu0
    %v1114 = vadd.f32 %v208, %v1113
    %1115 = vmatmul.f32.gmra.mxu0 %v578
    %v1116 = vpop.f32.mrf.mxu0
    %v1117 = vadd.f32 %v208, %v1116
    %1118 = vmatmul.f32.gmra.mxu0 %v581
    %v1119 = vpop.f32.mrf.mxu0
    %v1120 = vadd.f32 %v208, %v1119
    %1121 = vmatmul.f32.gmra.mxu0 %v584
    %v1122 = vpop.f32.mrf.mxu0
    %v1123 = vadd.f32 %v208, %v1122
    %1124 = vmatmul.f32.gmra.mxu0 %v587
    %v1125 = vpop.f32.mrf.mxu0
    %v1126 = vadd.f32 %v208, %v1125
    %1127 = vmatmul.f32.gmra.mxu0 %v590
    %v1128 = vpop.f32.mrf.mxu0
    %v1129 = vadd.f32 %v208, %v1128
    %1130 = vmatmul.f32.gmra.mxu0 %v593
    %v1131 = vpop.f32.mrf.mxu0
    %v1132 = vadd.f32 %v208, %v1131
    %1133 = vmatmul.f32.gmra.mxu0 %v596
    %v1134 = vpop.f32.mrf.mxu0
    %v1135 = vadd.f32 %v208, %v1134
    %1136 = vmatmul.f32.gmra.mxu0 %v599
    %v1137 = vpop.f32.mrf.mxu0
    %v1138 = vadd.f32 %v208, %v1137
    %1139 = vmatmul.f32.gmra.mxu0 %v602
    %v1140 = vpop.f32.mrf.mxu0
    %v1141 = vadd.f32 %v208, %v1140
    %1142 = vmatmul.f32.gmra.mxu0 %v605
    %v1143 = vpop.f32.mrf.mxu0
    %v1144 = vadd.f32 %v208, %v1143
    %1145 = vmatmul.f32.gmra.mxu0 %v608
    %v1146 = vpop.f32.mrf.mxu0
    %v1147 = vadd.f32 %v208, %v1146
    %1148 = vmatmul.f32.gmra.mxu0 %v611
    %v1149 = vpop.f32.mrf.mxu0
    %v1150 = vadd.f32 %v208, %v1149
    %1151 = vmatmul.f32.gmra.mxu0 %v614
    %v1152 = vpop.f32.mrf.mxu0
    %v1153 = vadd.f32 %v208, %v1152
    %1154 = vmatmul.f32.gmra.mxu0 %v617
    %v1155 = vpop.f32.mrf.mxu0
    %v1156 = vadd.f32 %v208, %v1155
    %1157 = vmatmul.f32.gmra.mxu0 %v620
    %v1158 = vpop.f32.mrf.mxu0
    %v1159 = vadd.f32 %v208, %v1158
    %1160 = vmatmul.f32.gmra.mxu0 %v623
    %v1161 = vpop.f32.mrf.mxu0
    %v1162 = vadd.f32 %v208, %v1161
    %1163 = vmatmul.f32.gmra.mxu0 %v626
    %v1164 = vpop.f32.mrf.mxu0
    %v1165 = vadd.f32 %v208, %v1164
    %1166 = vmatmul.f32.gmra.mxu0 %v629
    %v1167 = vpop.f32.mrf.mxu0
    %v1168 = vadd.f32 %v208, %v1167
    %1169 = vmatmul.f32.gmra.mxu0 %v632
    %v1170 = vpop.f32.mrf.mxu0
    %v1171 = vadd.f32 %v208, %v1170
    %1172 = vmatmul.f32.gmra.mxu0 %v635
    %v1173 = vpop.f32.mrf.mxu0
    %v1174 = vadd.f32 %v208, %v1173
    %1175 = vmatmul.f32.gmra.mxu0 %v638
    %v1176 = vpop.f32.mrf.mxu0
    %v1177 = vadd.f32 %v208, %v1176
    %1178 = vmatmul.f32.gmra.mxu0 %v641
    %v1179 = vpop.f32.mrf.mxu0
    %v1180 = vadd.f32 %v208, %v1179
    %1181 = vmatmul.f32.gmra.mxu0 %v644
    %v1182 = vpop.f32.mrf.mxu0
    %v1183 = vadd.f32 %v208, %v1182
    %1184 = vmatmul.f32.gmra.mxu0 %v647
    %v1185 = vpop.f32.mrf.mxu0
    %v1186 = vadd.f32 %v208, %v1185
    %1187 = vmatmul.f32.gmra.mxu0 %v650
    %v1188 = vpop.f32.mrf.mxu0
    %v1189 = vadd.f32 %v208, %v1188
    %1190 = vmatmul.f32.gmra.mxu0 %v653
    %v1191 = vpop.f32.mrf.mxu0
    %v1192 = vadd.f32 %v208, %v1191
    %1193 = vmatmul.f32.gmra.mxu0 %v656
    %v1194 = vpop.f32.mrf.mxu0
    %v1195 = vadd.f32 %v208, %v1194
    %1196 = vmatmul.f32.gmra.mxu0 %v659
    %v1197 = vpop.f32.mrf.mxu0
    %v1198 = vadd.f32 %v208, %v1197
    %1199 = vmatmul.f32.gmra.mxu0 %v662
    %v1200 = vpop.f32.mrf.mxu0
    %v1201 = vadd.f32 %v208, %v1200
    %1202 = vmatmul.f32.gmra.mxu0 %v665
    %v1203 = vpop.f32.mrf.mxu0
    %v1204 = vadd.f32 %v208, %v1203
    %1205 = vmatmul.f32.gmra.mxu0 %v668
    %v1206 = vpop.f32.mrf.mxu0
    %v1207 = vadd.f32 %v208, %v1206
    %1208 = vmatmul.f32.gmra.mxu0 %v671
    %v1209 = vpop.f32.mrf.mxu0
    %v1210 = vadd.f32 %v208, %v1209
    %1211 = vmatmul.f32.gmra.mxu0 %v674
    %v1212 = vpop.f32.mrf.mxu0
    %v1213 = vadd.f32 %v208, %v1212
    %1214 = vmatmul.f32.gmra.mxu0 %v677
    %v1215 = vpop.f32.mrf.mxu0
    %v1216 = vadd.f32 %v208, %v1215
    %1217 = vmatmul.f32.gmra.mxu0 %v680
    %v1218 = vpop.f32.mrf.mxu0
    %v1219 = vadd.f32 %v208, %v1218
    %1220 = vmatmul.f32.gmra.mxu0 %v683
    %v1221 = vpop.f32.mrf.mxu0
    %v1222 = vadd.f32 %v208, %v1221
    %1223 = vmatmul.f32.gmra.mxu0 %v686
    %v1224 = vpop.f32.mrf.mxu0
    %v1225 = vadd.f32 %v208, %v1224
    %1226 = vmatmul.f32.gmra.mxu0 %v689
    %v1227 = vpop.f32.mrf.mxu0
    %v1228 = vadd.f32 %v208, %v1227
    %1229 = vmatmul.f32.gmra.mxu0 %v692
    %v1230 = vpop.f32.mrf.mxu0
    %v1231 = vadd.f32 %v208, %v1230
    %1232 = vmatmul.f32.gmra.mxu0 %v695
    %v1233 = vpop.f32.mrf.mxu0
    %v1234 = vadd.f32 %v208, %v1233
    %1235 = vmatmul.f32.gmra.mxu0 %v698
    %v1236 = vpop.f32.mrf.mxu0
    %v1237 = vadd.f32 %v208, %v1236
    %1238 = vmatmul.f32.gmra.mxu0 %v701
    %v1239 = vpop.f32.mrf.mxu0
    %v1240 = vadd.f32 %v208, %v1239
    %1241 = vmatmul.f32.gmra.mxu0 %v704
    %v1242 = vpop.f32.mrf.mxu0
    %v1243 = vadd.f32 %v208, %v1242
    %1244 = vmatmul.f32.gmra.mxu0 %v707
    %v1245 = vpop.f32.mrf.mxu0
    %v1246 = vadd.f32 %v208, %v1245
    %1247 = vmatmul.f32.gmra.mxu0 %v710
    %v1248 = vpop.f32.mrf.mxu0
    %v1249 = vadd.f32 %v208, %v1248
    %1250 = vmatmul.f32.gmra.mxu0 %v713
    %v1251 = vpop.f32.mrf.mxu0
    %v1252 = vadd.f32 %v208, %v1251
    %1253 = vmatmul.f32.gmra.mxu0 %v716
    %v1254 = vpop.f32.mrf.mxu0
    %v1255 = vadd.f32 %v208, %v1254
    %1256 = vmatmul.f32.gmra.mxu0 %v719
    %v1257 = vpop.f32.mrf.mxu0
    %v1258 = vadd.f32 %v208, %v1257
    %1259 = vmatmul.f32.gmra.mxu0 %v722
    %v1260 = vpop.f32.mrf.mxu0
    %v1261 = vadd.f32 %v208, %v1260
    %1262 = vmatmul.f32.gmra.mxu0 %v725
    %v1263 = vpop.f32.mrf.mxu0
    %v1264 = vadd.f32 %v208, %v1263
    %1265 = vmatmul.f32.gmra.mxu0 %v728
    %v1266 = vpop.f32.mrf.mxu0
    %v1267 = vadd.f32 %v208, %v1266
    %1268 = vmatmul.f32.gmra.mxu0 %v731
    %v1269 = vpop.f32.mrf.mxu0
    %v1270 = vadd.f32 %v208, %v1269
    %1271 = vdwg.mxu0
    %v1272 = vmax.f32 %v751, 0.0
    %v1273 = vmax.f32 %v754, 0.0
    %v1274 = vmax.f32 %v757, 0.0
    %v1275 = vmax.f32 %v760, 0.0
    %v1276 = vmax.f32 %v763, 0.0
    %v1277 = vmax.f32 %v766, 0.0
    %v1278 = vmax.f32 %v769, 0.0
    %v1279 = vmax.f32 %v772, 0.0
    %v1280 = vmax.f32 %v775, 0.0
    %v1281 = vmax.f32 %v778, 0.0
    %v1282 = vmax.f32 %v781, 0.0
    %v1283 = vmax.f32 %v784, 0.0
    %v1284 = vmax.f32 %v787, 0.0
    %v1285 = vmax.f32 %v790, 0.0
    %v1286 = vmax.f32 %v793, 0.0
    %v1287 = vmax.f32 %v796, 0.0
    %v1288 = vmax.f32 %v799, 0.0
    %v1289 = vmax.f32 %v802, 0.0
    %v1290 = vmax.f32 %v805, 0.0
    %v1291 = vmax.f32 %v808, 0.0
    %v1292 = vmax.f32 %v811, 0.0
    %v1293 = vmax.f32 %v814, 0.0
    %v1294 = vmax.f32 %v817, 0.0
    %v1295 = vmax.f32 %v820, 0.0
    %v1296 = vmax.f32 %v823, 0.0
    %v1297 = vmax.f32 %v826, 0.0
    %v1298 = vmax.f32 %v829, 0.0
    %v1299 = vmax.f32 %v832, 0.0
    %v1300 = vmax.f32 %v835, 0.0
    %v1301 = vmax.f32 %v838, 0.0
    %v1302 = vmax.f32 %v841, 0.0
    %v1303 = vmax.f32 %v844, 0.0
    %v1304 = vmax.f32 %v847, 0.0
    %v1305 = vmax.f32 %v850, 0.0
    %v1306 = vmax.f32 %v853, 0.0
    %v1307 = vmax.f32 %v856, 0.0
    %v1308 = vmax.f32 %v859, 0.0
    %v1309 = vmax.f32 %v862, 0.0
    %v1310 = vmax.f32 %v865, 0.0
    %v1311 = vmax.f32 %v868, 0.0
    %v1312 = vmax.f32 %v871, 0.0
    %v1313 = vmax.f32 %v874, 0.0
    %v1314 = vmax.f32 %v877, 0.0
    %v1315 = vmax.f32 %v880, 0.0
    %v1316 = vmax.f32 %v883, 0.0
    %v1317 = vmax.f32 %v886, 0.0
    %v1318 = vmax.f32 %v889, 0.0
    %v1319 = vmax.f32 %v892, 0.0
    %v1320 = vmax.f32 %v895, 0.0
    %v1321 = vmax.f32 %v898, 0.0
    %v1322 = vmax.f32 %v901, 0.0
    %v1323 = vmax.f32 %v904, 0.0
    %v1324 = vmax.f32 %v907, 0.0
    %v1325 = vmax.f32 %v910, 0.0
    %v1326 = vmax.f32 %v913, 0.0
    %v1327 = vmax.f32 %v916, 0.0
    %v1328 = vmax.f32 %v919, 0.0
    %v1329 = vmax.f32 %v922, 0.0
    %v1330 = vmax.f32 %v925, 0.0
    %v1331 = vmax.f32 %v928, 0.0
    %v1332 = vmax.f32 %v931, 0.0
    %v1333 = vmax.f32 %v934, 0.0
    %v1334 = vmax.f32 %v937, 0.0
    %v1335 = vmax.f32 %v940, 0.0
    %v1336 = vmax.f32 %v943, 0.0
    %v1337 = vmax.f32 %v946, 0.0
    %v1338 = vmax.f32 %v949, 0.0
    %v1339 = vmax.f32 %v952, 0.0
    %v1340 = vmax.f32 %v955, 0.0
    %v1341 = vmax.f32 %v958, 0.0
    %v1342 = vmax.f32 %v961, 0.0
    %v1343 = vmax.f32 %v964, 0.0
    %v1344 = vmax.f32 %v967, 0.0
    %v1345 = vmax.f32 %v970, 0.0
    %v1346 = vmax.f32 %v973, 0.0
    %v1347 = vmax.f32 %v976, 0.0
    %v1348 = vmax.f32 %v979, 0.0
    %v1349 = vmax.f32 %v982, 0.0
    %v1350 = vmax.f32 %v985, 0.0
    %v1351 = vmax.f32 %v988, 0.0
    %v1352 = vmax.f32 %v991, 0.0
    %v1353 = vmax.f32 %v994, 0.0
    %v1354 = vmax.f32 %v997, 0.0
    %v1355 = vmax.f32 %v1000, 0.0
    %v1356 = vmax.f32 %v1003, 0.0
    %v1357 = vmax.f32 %v1006, 0.0
    %v1358 = vmax.f32 %v1009, 0.0
    %v1359 = vmax.f32 %v1012, 0.0
    %v1360 = vmax.f32 %v1015, 0.0
    %v1361 = vmax.f32 %v1018, 0.0
    %v1362 = vmax.f32 %v1021, 0.0
    %v1363 = vmax.f32 %v1024, 0.0
    %v1364 = vmax.f32 %v1027, 0.0
    %v1365 = vmax.f32 %v1030, 0.0
    %v1366 = vmax.f32 %v1033, 0.0
    %v1367 = vmax.f32 %v1036, 0.0
    %v1368 = vmax.f32 %v1039, 0.0
    %v1369 = vmax.f32 %v1042, 0.0
    %v1370 = vmax.f32 %v1045, 0.0
    %v1371 = vmax.f32 %v1048, 0.0
    %v1372 = vmax.f32 %v1051, 0.0
    %v1373 = vmax.f32 %v1054, 0.0
    %v1374 = vmax.f32 %v1057, 0.0
    %v1375 = vmax.f32 %v1060, 0.0
    %v1376 = vmax.f32 %v1063, 0.0
    %v1377 = vmax.f32 %v1066, 0.0
    %v1378 = vmax.f32 %v1069, 0.0
    %v1379 = vmax.f32 %v1072, 0.0
    %v1380 = vmax.f32 %v1075, 0.0
    %v1381 = vmax.f32 %v1078, 0.0
    %v1382 = vmax.f32 %v1081, 0.0
    %v1383 = vmax.f32 %v1084, 0.0
    %v1384 = vmax.f32 %v1087, 0.0
    %v1385 = vmax.f32 %v1090, 0.0
    %v1386 = vmax.f32 %v1093, 0.0
    %v1387 = vmax.f32 %v1096, 0.0
    %v1388 = vmax.f32 %v1099, 0.0
    %v1389 = vmax.f32 %v1102, 0.0
    %v1390 = vmax.f32 %v1105, 0.0
    %v1391 = vmax.f32 %v1108, 0.0
    %v1392 = vmax.f32 %v1111, 0.0
    %v1393 = vmax.f32 %v1114, 0.0
    %v1394 = vmax.f32 %v1117, 0.0
    %v1395 = vmax.f32 %v1120, 0.0
    %v1396 = vmax.f32 %v1123, 0.0
    %v1397 = vmax.f32 %v1126, 0.0
    %v1398 = vmax.f32 %v1129, 0.0
    %v1399 = vmax.f32 %v1132, 0.0
    %v1400 = vmax.f32 %v1135, 0.0
    %v1401 = vmax.f32 %v1138, 0.0
    %v1402 = vmax.f32 %v1141, 0.0
    %v1403 = vmax.f32 %v1144, 0.0
    %v1404 = vmax.f32 %v1147, 0.0
    %v1405 = vmax.f32 %v1150, 0.0
    %v1406 = vmax.f32 %v1153, 0.0
    %v1407 = vmax.f32 %v1156, 0.0
    %v1408 = vmax.f32 %v1159, 0.0
    %v1409 = vmax.f32 %v1162, 0.0
    %v1410 = vmax.f32 %v1165, 0.0
    %v1411 = vmax.f32 %v1168, 0.0
    %v1412 = vmax.f32 %v1171, 0.0
    %v1413 = vmax.f32 %v1174, 0.0
    %v1414 = vmax.f32 %v1177, 0.0
    %v1415 = vmax.f32 %v1180, 0.0
    %v1416 = vmax.f32 %v1183, 0.0
    %v1417 = vmax.f32 %v1186, 0.0
    %v1418 = vmax.f32 %v1189, 0.0
    %v1419 = vmax.f32 %v1192, 0.0
    %v1420 = vmax.f32 %v1195, 0.0
    %v1421 = vmax.f32 %v1198, 0.0
    %v1422 = vmax.f32 %v1201, 0.0
    %v1423 = vmax.f32 %v1204, 0.0
    %v1424 = vmax.f32 %v1207, 0.0
    %v1425 = vmax.f32 %v1210, 0.0
    %v1426 = vmax.f32 %v1213, 0.0
    %v1427 = vmax.f32 %v1216, 0.0
    %v1428 = vmax.f32 %v1219, 0.0
    %v1429 = vmax.f32 %v1222, 0.0
    %v1430 = vmax.f32 %v1225, 0.0
    %v1431 = vmax.f32 %v1228, 0.0
    %v1432 = vmax.f32 %v1231, 0.0
    %v1433 = vmax.f32 %v1234, 0.0
    %v1434 = vmax.f32 %v1237, 0.0
    %v1435 = vmax.f32 %v1240, 0.0
    %v1436 = vmax.f32 %v1243, 0.0
    %v1437 = vmax.f32 %v1246, 0.0
    %v1438 = vmax.f32 %v1249, 0.0
    %v1439 = vmax.f32 %v1252, 0.0
    %v1440 = vmax.f32 %v1255, 0.0
    %v1441 = vmax.f32 %v1258, 0.0
    %v1442 = vmax.f32 %v1261, 0.0
    %v1443 = vmax.f32 %v1264, 0.0
    %v1444 = vmax.f32 %v1267, 0.0
    %v1445 = vmax.f32 %v1270, 0.0
    %v1446 = vld [vmem:[%s3] sm:$0xff]
    %v1447 = vld [vmem:[%s3 + $0x8] sm:$0xff]
    %v1448 = vld [vmem:[%s3 + $0x10] sm:$0xff]
    %v1449 = vld [vmem:[%s3 + $0x18] sm:$0xff]
    %v1450 = vld [vmem:[%s4] sm:$0x1]
    %v1452 = vperm.slane %v1450, 0
    %vm1454 = vcmask 261120
    %v1456 = vsel %vm1454, %v1272, 0
    %v1459 = vsel %vm1454, %v1273, 0
    %v1462 = vsel %vm1454, %v1274, 0
    %v1465 = vsel %vm1454, %v1275, 0
    %v1468 = vsel %vm1454, %v1276, 0
    %v1471 = vsel %vm1454, %v1277, 0
    %v1474 = vsel %vm1454, %v1278, 0
    %v1477 = vsel %vm1454, %v1279, 0
    %v1480 = vsel %vm1454, %v1280, 0
    %v1483 = vsel %vm1454, %v1281, 0
    %v1486 = vsel %vm1454, %v1282, 0
    %v1489 = vsel %vm1454, %v1283, 0
    %v1492 = vsel %vm1454, %v1284, 0
    %v1495 = vsel %vm1454, %v1285, 0
    %v1498 = vsel %vm1454, %v1286, 0
    %v1501 = vsel %vm1454, %v1287, 0
    %v1504 = vsel %vm1454, %v1288, 0
    %v1507 = vsel %vm1454, %v1289, 0
    %v1510 = vsel %vm1454, %v1290, 0
    %v1513 = vsel %vm1454, %v1291, 0
    %v1516 = vsel %vm1454, %v1292, 0
    %v1519 = vsel %vm1454, %v1293, 0
    %v1522 = vsel %vm1454, %v1294, 0
    %v1525 = vsel %vm1454, %v1295, 0
    %v1528 = vsel %vm1454, %v1296, 0
    %v1531 = vsel %vm1454, %v1297, 0
    %v1534 = vsel %vm1454, %v1298, 0
    %v1537 = vsel %vm1454, %v1299, 0
    %v1540 = vsel %vm1454, %v1300, 0
    %v1543 = vsel %vm1454, %v1301, 0
    %v1546 = vsel %vm1454, %v1302, 0
    %v1549 = vsel %vm1454, %v1303, 0
    %v1552 = vsel %vm1454, %v1304, 0
    %v1555 = vsel %vm1454, %v1305, 0
    %v1558 = vsel %vm1454, %v1306, 0
    %v1561 = vsel %vm1454, %v1307, 0
    %v1564 = vsel %vm1454, %v1308, 0
    %v1567 = vsel %vm1454, %v1309, 0
    %v1570 = vsel %vm1454, %v1310, 0
    %v1573 = vsel %vm1454, %v1311, 0
    %v1576 = vsel %vm1454, %v1312, 0
    %v1579 = vsel %vm1454, %v1313, 0
    %v1582 = vsel %vm1454, %v1314, 0
    %v1585 = vsel %vm1454, %v1315, 0
    %v1588 = vsel %vm1454, %v1316, 0
    %v1591 = vsel %vm1454, %v1317, 0
    %v1594 = vsel %vm1454, %v1318, 0
    %v1597 = vsel %vm1454, %v1319, 0
    %v1600 = vsel %vm1454, %v1320, 0
    %v1603 = vsel %vm1454, %v1321, 0
    %v1606 = vsel %vm1454, %v1322, 0
    %v1609 = vsel %vm1454, %v1323, 0
    %v1612 = vsel %vm1454, %v1324, 0
    %v1615 = vsel %vm1454, %v1325, 0
    %v1618 = vsel %vm1454, %v1326, 0
    %v1621 = vsel %vm1454, %v1327, 0
    %v1624 = vsel %vm1454, %v1328, 0
    %v1627 = vsel %vm1454, %v1329, 0
    %v1630 = vsel %vm1454, %v1330, 0
    %v1633 = vsel %vm1454, %v1331, 0
    %v1636 = vsel %vm1454, %v1332, 0
    %v1639 = vsel %vm1454, %v1333, 0
    %v1642 = vsel %vm1454, %v1334, 0
    %v1645 = vsel %vm1454, %v1335, 0
    %v1648 = vsel %vm1454, %v1336, 0
    %v1651 = vsel %vm1454, %v1337, 0
    %v1654 = vsel %vm1454, %v1338, 0
    %v1657 = vsel %vm1454, %v1339, 0
    %v1660 = vsel %vm1454, %v1340, 0
    %v1663 = vsel %vm1454, %v1341, 0
    %v1666 = vsel %vm1454, %v1342, 0
    %v1669 = vsel %vm1454, %v1343, 0
    %v1672 = vsel %vm1454, %v1344, 0
    %v1675 = vsel %vm1454, %v1345, 0
    %v1678 = vsel %vm1454, %v1346, 0
    %v1681 = vsel %vm1454, %v1347, 0
    %v1684 = vsel %vm1454, %v1348, 0
    %v1687 = vsel %vm1454, %v1349, 0
    %v1690 = vsel %vm1454, %v1350, 0
    %v1693 = vsel %vm1454, %v1351, 0
    %v1696 = vsel %vm1454, %v1352, 0
    %v1699 = vsel %vm1454, %v1353, 0
    %v1702 = vsel %vm1454, %v1354, 0
    %v1705 = vsel %vm1454, %v1355, 0
    %v1708 = vsel %vm1454, %v1356, 0
    %v1711 = vsel %vm1454, %v1357, 0
    %v1714 = vsel %vm1454, %v1358, 0
    %v1717 = vsel %vm1454, %v1359, 0
    %v1720 = vsel %vm1454, %v1360, 0
    %v1723 = vsel %vm1454, %v1361, 0
    %v1726 = vsel %vm1454, %v1362, 0
    %v1729 = vsel %vm1454, %v1363, 0
    %v1732 = vsel %vm1454, %v1364, 0
    %v1735 = vsel %vm1454, %v1365, 0
    %v1738 = vsel %vm1454, %v1366, 0
    %v1741 = vsel %vm1454, %v1367, 0
    %v1744 = vsel %vm1454, %v1368, 0
    %v1747 = vsel %vm1454, %v1369, 0
    %v1750 = vsel %vm1454, %v1370, 0
    %v1753 = vsel %vm1454, %v1371, 0
    %v1756 = vsel %vm1454, %v1372, 0
    %v1759 = vsel %vm1454, %v1373, 0
    %v1762 = vsel %vm1454, %v1374, 0
    %v1765 = vsel %vm1454, %v1375, 0
    %v1768 = vsel %vm1454, %v1376, 0
    %v1771 = vsel %vm1454, %v1377, 0
    %v1774 = vsel %vm1454, %v1378, 0
    %v1777 = vsel %vm1454, %v1379, 0
    %v1780 = vsel %vm1454, %v1380, 0
    %v1783 = vsel %vm1454, %v1381, 0
    %v1786 = vsel %vm1454, %v1382, 0
    %v1789 = vsel %vm1454, %v1383, 0
    %v1792 = vsel %vm1454, %v1384, 0
    %v1795 = vsel %vm1454, %v1385, 0
    %v1798 = vsel %vm1454, %v1386, 0
    %v1801 = vsel %vm1454, %v1387, 0
    %v1804 = vsel %vm1454, %v1388, 0
    %v1807 = vsel %vm1454, %v1389, 0
    %v1810 = vsel %vm1454, %v1390, 0
    %v1813 = vsel %vm1454, %v1391, 0
    %v1816 = vsel %vm1454, %v1392, 0
    %v1819 = vsel %vm1454, %v1393, 0
    %v1822 = vsel %vm1454, %v1394, 0
    %v1825 = vsel %vm1454, %v1395, 0
    %v1828 = vsel %vm1454, %v1396, 0
    %v1831 = vsel %vm1454, %v1397, 0
    %v1834 = vsel %vm1454, %v1398, 0
    %v1837 = vsel %vm1454, %v1399, 0
    %v1840 = vsel %vm1454, %v1400, 0
    %v1843 = vsel %vm1454, %v1401, 0
    %v1846 = vsel %vm1454, %v1402, 0
    %v1849 = vsel %vm1454, %v1403, 0
    %v1852 = vsel %vm1454, %v1404, 0
    %v1855 = vsel %vm1454, %v1405, 0
    %v1858 = vsel %vm1454, %v1406, 0
    %v1861 = vsel %vm1454, %v1407, 0
    %v1864 = vsel %vm1454, %v1408, 0
    %v1867 = vsel %vm1454, %v1409, 0
    %v1870 = vsel %vm1454, %v1410, 0
    %v1873 = vsel %vm1454, %v1411, 0
    %v1876 = vsel %vm1454, %v1412, 0
    %v1879 = vsel %vm1454, %v1413, 0
    %v1882 = vsel %vm1454, %v1414, 0
    %v1885 = vsel %vm1454, %v1415, 0
    %v1888 = vsel %vm1454, %v1416, 0
    %v1891 = vsel %vm1454, %v1417, 0
    %v1894 = vsel %vm1454, %v1418, 0
    %v1897 = vsel %vm1454, %v1419, 0
    %v1900 = vsel %vm1454, %v1420, 0
    %v1903 = vsel %vm1454, %v1421, 0
    %v1906 = vsel %vm1454, %v1422, 0
    %v1909 = vsel %vm1454, %v1423, 0
    %v1912 = vsel %vm1454, %v1424, 0
    %v1915 = vsel %vm1454, %v1425, 0
    %v1918 = vsel %vm1454, %v1426, 0
    %v1921 = vsel %vm1454, %v1427, 0
    %v1924 = vsel %vm1454, %v1428, 0
    %v1927 = vsel %vm1454, %v1429, 0
    %v1930 = vsel %vm1454, %v1430, 0
    %v1933 = vsel %vm1454, %v1431, 0
    %v1936 = vsel %vm1454, %v1432, 0
    %v1939 = vsel %vm1454, %v1433, 0
    %v1942 = vsel %vm1454, %v1434, 0
    %v1945 = vsel %vm1454, %v1435, 0
    %v1948 = vsel %vm1454, %v1436, 0
    %v1951 = vsel %vm1454, %v1437, 0
    %v1954 = vsel %vm1454, %v1438, 0
    %v1957 = vsel %vm1454, %v1439, 0
    %v1960 = vsel %vm1454, %v1440, 0
    %v1963 = vsel %vm1454, %v1441, 0
    %v1966 = vsel %vm1454, %v1442, 0
    %v1969 = vsel %vm1454, %v1443, 0
    %v1972 = vsel %vm1454, %v1444, 0
    %v1975 = vsel %vm1454, %v1445, 0
    %1977 = vmatpush.msra.mxu0 0.0
    %1978 = vmatpush.msra.mxu0 0.0
    %1979 = vmatpush.msra.mxu0 0.0
    %1980 = vmatpush.msra.mxu0 0.0
    %1981 = vmatpush.msra.mxu0 0.0
    %1982 = vmatpush.msra.mxu0 0.0
    %1983 = vmatpush.msra.mxu0 0.0
    %1984 = vmatpush.msra.mxu0 0.0
    %1985 = vmatpush.msra.mxu0 0.0
    %1986 = vmatpush.msra.mxu0 0.0
    %1987 = vmatpush.msra.mxu0 0.0
    %1988 = vmatpush.msra.mxu0 0.0
    %1989 = vmatpush.msra.mxu0 %v1449
    %1990 = vmatpush.msra.mxu0 %v1448
    %1991 = vmatpush.msra.mxu0 %v1447
    %1992 = vmatpush.msra.mxu0 %v1446
    %1993 = vmatmul.f32.gmra.mxu0 %v1456
    %v1994 = vpop.f32.mrf.mxu0
    %v1995 = vadd.f32 %v1452, %v1994
    %1996 = vmatmul.f32.gmra.mxu0 %v1459
    %v1997 = vpop.f32.mrf.mxu0
    %v1998 = vadd.f32 %v1452, %v1997
    %1999 = vmatmul.f32.gmra.mxu0 %v1462
    %v2000 = vpop.f32.mrf.mxu0
    %v2001 = vadd.f32 %v1452, %v2000
    %2002 = vmatmul.f32.gmra.mxu0 %v1465
    %v2003 = vpop.f32.mrf.mxu0
    %v2004 = vadd.f32 %v1452, %v2003
    %2005 = vmatmul.f32.gmra.mxu0 %v1468
    %v2006 = vpop.f32.mrf.mxu0
    %v2007 = vadd.f32 %v1452, %v2006
    %2008 = vmatmul.f32.gmra.mxu0 %v1471
    %v2009 = vpop.f32.mrf.mxu0
    %v2010 = vadd.f32 %v1452, %v2009
    %2011 = vmatmul.f32.gmra.mxu0 %v1474
    %v2012 = vpop.f32.mrf.mxu0
    %v2013 = vadd.f32 %v1452, %v2012
    %2014 = vmatmul.f32.gmra.mxu0 %v1477
    %v2015 = vpop.f32.mrf.mxu0
    %v2016 = vadd.f32 %v1452, %v2015
    %2017 = vmatmul.f32.gmra.mxu0 %v1480
    %v2018 = vpop.f32.mrf.mxu0
    %v2019 = vadd.f32 %v1452, %v2018
    %2020 = vmatmul.f32.gmra.mxu0 %v1483
    %v2021 = vpop.f32.mrf.mxu0
    %v2022 = vadd.f32 %v1452, %v2021
    %2023 = vmatmul.f32.gmra.mxu0 %v1486
    %v2024 = vpop.f32.mrf.mxu0
    %v2025 = vadd.f32 %v1452, %v2024
    %2026 = vmatmul.f32.gmra.mxu0 %v1489
    %v2027 = vpop.f32.mrf.mxu0
    %v2028 = vadd.f32 %v1452, %v2027
    %2029 = vmatmul.f32.gmra.mxu0 %v1492
    %v2030 = vpop.f32.mrf.mxu0
    %v2031 = vadd.f32 %v1452, %v2030
    %2032 = vmatmul.f32.gmra.mxu0 %v1495
    %v2033 = vpop.f32.mrf.mxu0
    %v2034 = vadd.f32 %v1452, %v2033
    %2035 = vmatmul.f32.gmra.mxu0 %v1498
    %v2036 = vpop.f32.mrf.mxu0
    %v2037 = vadd.f32 %v1452, %v2036
    %2038 = vmatmul.f32.gmra.mxu0 %v1501
    %v2039 = vpop.f32.mrf.mxu0
    %v2040 = vadd.f32 %v1452, %v2039
    %2041 = vmatmul.f32.gmra.mxu0 %v1504
    %v2042 = vpop.f32.mrf.mxu0
    %v2043 = vadd.f32 %v1452, %v2042
    %2044 = vmatmul.f32.gmra.mxu0 %v1507
    %v2045 = vpop.f32.mrf.mxu0
    %v2046 = vadd.f32 %v1452, %v2045
    %2047 = vmatmul.f32.gmra.mxu0 %v1510
    %v2048 = vpop.f32.mrf.mxu0
    %v2049 = vadd.f32 %v1452, %v2048
    %2050 = vmatmul.f32.gmra.mxu0 %v1513
    %v2051 = vpop.f32.mrf.mxu0
    %v2052 = vadd.f32 %v1452, %v2051
    %2053 = vmatmul.f32.gmra.mxu0 %v1516
    %v2054 = vpop.f32.mrf.mxu0
    %v2055 = vadd.f32 %v1452, %v2054
    %2056 = vmatmul.f32.gmra.mxu0 %v1519
    %v2057 = vpop.f32.mrf.mxu0
    %v2058 = vadd.f32 %v1452, %v2057
    %2059 = vmatmul.f32.gmra.mxu0 %v1522
    %v2060 = vpop.f32.mrf.mxu0
    %v2061 = vadd.f32 %v1452, %v2060
    %2062 = vmatmul.f32.gmra.mxu0 %v1525
    %v2063 = vpop.f32.mrf.mxu0
    %v2064 = vadd.f32 %v1452, %v2063
    %2065 = vmatmul.f32.gmra.mxu0 %v1528
    %v2066 = vpop.f32.mrf.mxu0
    %v2067 = vadd.f32 %v1452, %v2066
    %2068 = vmatmul.f32.gmra.mxu0 %v1531
    %v2069 = vpop.f32.mrf.mxu0
    %v2070 = vadd.f32 %v1452, %v2069
    %2071 = vmatmul.f32.gmra.mxu0 %v1534
    %v2072 = vpop.f32.mrf.mxu0
    %v2073 = vadd.f32 %v1452, %v2072
    %2074 = vmatmul.f32.gmra.mxu0 %v1537
    %v2075 = vpop.f32.mrf.mxu0
    %v2076 = vadd.f32 %v1452, %v2075
    %2077 = vmatmul.f32.gmra.mxu0 %v1540
    %v2078 = vpop.f32.mrf.mxu0
    %v2079 = vadd.f32 %v1452, %v2078
    %2080 = vmatmul.f32.gmra.mxu0 %v1543
    %v2081 = vpop.f32.mrf.mxu0
    %v2082 = vadd.f32 %v1452, %v2081
    %2083 = vmatmul.f32.gmra.mxu0 %v1546
    %v2084 = vpop.f32.mrf.mxu0
    %v2085 = vadd.f32 %v1452, %v2084
    %2086 = vmatmul.f32.gmra.mxu0 %v1549
    %v2087 = vpop.f32.mrf.mxu0
    %v2088 = vadd.f32 %v1452, %v2087
    %2089 = vmatmul.f32.gmra.mxu0 %v1552
    %v2090 = vpop.f32.mrf.mxu0
    %v2091 = vadd.f32 %v1452, %v2090
    %2092 = vmatmul.f32.gmra.mxu0 %v1555
    %v2093 = vpop.f32.mrf.mxu0
    %v2094 = vadd.f32 %v1452, %v2093
    %2095 = vmatmul.f32.gmra.mxu0 %v1558
    %v2096 = vpop.f32.mrf.mxu0
    %v2097 = vadd.f32 %v1452, %v2096
    %2098 = vmatmul.f32.gmra.mxu0 %v1561
    %v2099 = vpop.f32.mrf.mxu0
    %v2100 = vadd.f32 %v1452, %v2099
    %2101 = vmatmul.f32.gmra.mxu0 %v1564
    %v2102 = vpop.f32.mrf.mxu0
    %v2103 = vadd.f32 %v1452, %v2102
    %2104 = vmatmul.f32.gmra.mxu0 %v1567
    %v2105 = vpop.f32.mrf.mxu0
    %v2106 = vadd.f32 %v1452, %v2105
    %2107 = vmatmul.f32.gmra.mxu0 %v1570
    %v2108 = vpop.f32.mrf.mxu0
    %v2109 = vadd.f32 %v1452, %v2108
    %2110 = vmatmul.f32.gmra.mxu0 %v1573
    %v2111 = vpop.f32.mrf.mxu0
    %v2112 = vadd.f32 %v1452, %v2111
    %2113 = vmatmul.f32.gmra.mxu0 %v1576
    %v2114 = vpop.f32.mrf.mxu0
    %v2115 = vadd.f32 %v1452, %v2114
    %2116 = vmatmul.f32.gmra.mxu0 %v1579
    %v2117 = vpop.f32.mrf.mxu0
    %v2118 = vadd.f32 %v1452, %v2117
    %2119 = vmatmul.f32.gmra.mxu0 %v1582
    %v2120 = vpop.f32.mrf.mxu0
    %v2121 = vadd.f32 %v1452, %v2120
    %2122 = vmatmul.f32.gmra.mxu0 %v1585
    %v2123 = vpop.f32.mrf.mxu0
    %v2124 = vadd.f32 %v1452, %v2123
    %2125 = vmatmul.f32.gmra.mxu0 %v1588
    %v2126 = vpop.f32.mrf.mxu0
    %v2127 = vadd.f32 %v1452, %v2126
    %2128 = vmatmul.f32.gmra.mxu0 %v1591
    %v2129 = vpop.f32.mrf.mxu0
    %v2130 = vadd.f32 %v1452, %v2129
    %2131 = vmatmul.f32.gmra.mxu0 %v1594
    %v2132 = vpop.f32.mrf.mxu0
    %v2133 = vadd.f32 %v1452, %v2132
    %2134 = vmatmul.f32.gmra.mxu0 %v1597
    %v2135 = vpop.f32.mrf.mxu0
    %v2136 = vadd.f32 %v1452, %v2135
    %2137 = vmatmul.f32.gmra.mxu0 %v1600
    %v2138 = vpop.f32.mrf.mxu0
    %v2139 = vadd.f32 %v1452, %v2138
    %2140 = vmatmul.f32.gmra.mxu0 %v1603
    %v2141 = vpop.f32.mrf.mxu0
    %v2142 = vadd.f32 %v1452, %v2141
    %2143 = vmatmul.f32.gmra.mxu0 %v1606
    %v2144 = vpop.f32.mrf.mxu0
    %v2145 = vadd.f32 %v1452, %v2144
    %2146 = vmatmul.f32.gmra.mxu0 %v1609
    %v2147 = vpop.f32.mrf.mxu0
    %v2148 = vadd.f32 %v1452, %v2147
    %2149 = vmatmul.f32.gmra.mxu0 %v1612
    %v2150 = vpop.f32.mrf.mxu0
    %v2151 = vadd.f32 %v1452, %v2150
    %2152 = vmatmul.f32.gmra.mxu0 %v1615
    %v2153 = vpop.f32.mrf.mxu0
    %v2154 = vadd.f32 %v1452, %v2153
    %2155 = vmatmul.f32.gmra.mxu0 %v1618
    %v2156 = vpop.f32.mrf.mxu0
    %v2157 = vadd.f32 %v1452, %v2156
    %2158 = vmatmul.f32.gmra.mxu0 %v1621
    %v2159 = vpop.f32.mrf.mxu0
    %v2160 = vadd.f32 %v1452, %v2159
    %2161 = vmatmul.f32.gmra.mxu0 %v1624
    %v2162 = vpop.f32.mrf.mxu0
    %v2163 = vadd.f32 %v1452, %v2162
    %2164 = vmatmul.f32.gmra.mxu0 %v1627
    %v2165 = vpop.f32.mrf.mxu0
    %v2166 = vadd.f32 %v1452, %v2165
    %2167 = vmatmul.f32.gmra.mxu0 %v1630
    %v2168 = vpop.f32.mrf.mxu0
    %v2169 = vadd.f32 %v1452, %v2168
    %2170 = vmatmul.f32.gmra.mxu0 %v1633
    %v2171 = vpop.f32.mrf.mxu0
    %v2172 = vadd.f32 %v1452, %v2171
    %2173 = vmatmul.f32.gmra.mxu0 %v1636
    %v2174 = vpop.f32.mrf.mxu0
    %v2175 = vadd.f32 %v1452, %v2174
    %2176 = vmatmul.f32.gmra.mxu0 %v1639
    %v2177 = vpop.f32.mrf.mxu0
    %v2178 = vadd.f32 %v1452, %v2177
    %2179 = vmatmul.f32.gmra.mxu0 %v1642
    %v2180 = vpop.f32.mrf.mxu0
    %v2181 = vadd.f32 %v1452, %v2180
    %2182 = vmatmul.f32.gmra.mxu0 %v1645
    %v2183 = vpop.f32.mrf.mxu0
    %v2184 = vadd.f32 %v1452, %v2183
    %2185 = vmatmul.f32.gmra.mxu0 %v1648
    %v2186 = vpop.f32.mrf.mxu0
    %v2187 = vadd.f32 %v1452, %v2186
    %2188 = vmatmul.f32.gmra.mxu0 %v1651
    %v2189 = vpop.f32.mrf.mxu0
    %v2190 = vadd.f32 %v1452, %v2189
    %2191 = vmatmul.f32.gmra.mxu0 %v1654
    %v2192 = vpop.f32.mrf.mxu0
    %v2193 = vadd.f32 %v1452, %v2192
    %2194 = vmatmul.f32.gmra.mxu0 %v1657
    %v2195 = vpop.f32.mrf.mxu0
    %v2196 = vadd.f32 %v1452, %v2195
    %2197 = vmatmul.f32.gmra.mxu0 %v1660
    %v2198 = vpop.f32.mrf.mxu0
    %v2199 = vadd.f32 %v1452, %v2198
    %2200 = vmatmul.f32.gmra.mxu0 %v1663
    %v2201 = vpop.f32.mrf.mxu0
    %v2202 = vadd.f32 %v1452, %v2201
    %2203 = vmatmul.f32.gmra.mxu0 %v1666
    %v2204 = vpop.f32.mrf.mxu0
    %v2205 = vadd.f32 %v1452, %v2204
    %2206 = vmatmul.f32.gmra.mxu0 %v1669
    %v2207 = vpop.f32.mrf.mxu0
    %v2208 = vadd.f32 %v1452, %v2207
    %2209 = vmatmul.f32.gmra.mxu0 %v1672
    %v2210 = vpop.f32.mrf.mxu0
    %v2211 = vadd.f32 %v1452, %v2210
    %2212 = vmatmul.f32.gmra.mxu0 %v1675
    %v2213 = vpop.f32.mrf.mxu0
    %v2214 = vadd.f32 %v1452, %v2213
    %2215 = vmatmul.f32.gmra.mxu0 %v1678
    %v2216 = vpop.f32.mrf.mxu0
    %v2217 = vadd.f32 %v1452, %v2216
    %2218 = vmatmul.f32.gmra.mxu0 %v1681
    %v2219 = vpop.f32.mrf.mxu0
    %v2220 = vadd.f32 %v1452, %v2219
    %2221 = vmatmul.f32.gmra.mxu0 %v1684
    %v2222 = vpop.f32.mrf.mxu0
    %v2223 = vadd.f32 %v1452, %v2222
    %2224 = vmatmul.f32.gmra.mxu0 %v1687
    %v2225 = vpop.f32.mrf.mxu0
    %v2226 = vadd.f32 %v1452, %v2225
    %2227 = vmatmul.f32.gmra.mxu0 %v1690
    %v2228 = vpop.f32.mrf.mxu0
    %v2229 = vadd.f32 %v1452, %v2228
    %2230 = vmatmul.f32.gmra.mxu0 %v1693
    %v2231 = vpop.f32.mrf.mxu0
    %v2232 = vadd.f32 %v1452, %v2231
    %2233 = vmatmul.f32.gmra.mxu0 %v1696
    %v2234 = vpop.f32.mrf.mxu0
    %v2235 = vadd.f32 %v1452, %v2234
    %2236 = vmatmul.f32.gmra.mxu0 %v1699
    %v2237 = vpop.f32.mrf.mxu0
    %v2238 = vadd.f32 %v1452, %v2237
    %2239 = vmatmul.f32.gmra.mxu0 %v1702
    %v2240 = vpop.f32.mrf.mxu0
    %v2241 = vadd.f32 %v1452, %v2240
    %2242 = vmatmul.f32.gmra.mxu0 %v1705
    %v2243 = vpop.f32.mrf.mxu0
    %v2244 = vadd.f32 %v1452, %v2243
    %2245 = vmatmul.f32.gmra.mxu0 %v1708
    %v2246 = vpop.f32.mrf.mxu0
    %v2247 = vadd.f32 %v1452, %v2246
    %2248 = vmatmul.f32.gmra.mxu0 %v1711
    %v2249 = vpop.f32.mrf.mxu0
    %v2250 = vadd.f32 %v1452, %v2249
    %2251 = vmatmul.f32.gmra.mxu0 %v1714
    %v2252 = vpop.f32.mrf.mxu0
    %v2253 = vadd.f32 %v1452, %v2252
    %2254 = vmatmul.f32.gmra.mxu0 %v1717
    %v2255 = vpop.f32.mrf.mxu0
    %v2256 = vadd.f32 %v1452, %v2255
    %2257 = vmatmul.f32.gmra.mxu0 %v1720
    %v2258 = vpop.f32.mrf.mxu0
    %v2259 = vadd.f32 %v1452, %v2258
    %2260 = vmatmul.f32.gmra.mxu0 %v1723
    %v2261 = vpop.f32.mrf.mxu0
    %v2262 = vadd.f32 %v1452, %v2261
    %2263 = vmatmul.f32.gmra.mxu0 %v1726
    %v2264 = vpop.f32.mrf.mxu0
    %v2265 = vadd.f32 %v1452, %v2264
    %2266 = vmatmul.f32.gmra.mxu0 %v1729
    %v2267 = vpop.f32.mrf.mxu0
    %v2268 = vadd.f32 %v1452, %v2267
    %2269 = vmatmul.f32.gmra.mxu0 %v1732
    %v2270 = vpop.f32.mrf.mxu0
    %v2271 = vadd.f32 %v1452, %v2270
    %2272 = vmatmul.f32.gmra.mxu0 %v1735
    %v2273 = vpop.f32.mrf.mxu0
    %v2274 = vadd.f32 %v1452, %v2273
    %2275 = vmatmul.f32.gmra.mxu0 %v1738
    %v2276 = vpop.f32.mrf.mxu0
    %v2277 = vadd.f32 %v1452, %v2276
    %2278 = vmatmul.f32.gmra.mxu0 %v1741
    %v2279 = vpop.f32.mrf.mxu0
    %v2280 = vadd.f32 %v1452, %v2279
    %2281 = vmatmul.f32.gmra.mxu0 %v1744
    %v2282 = vpop.f32.mrf.mxu0
    %v2283 = vadd.f32 %v1452, %v2282
    %2284 = vmatmul.f32.gmra.mxu0 %v1747
    %v2285 = vpop.f32.mrf.mxu0
    %v2286 = vadd.f32 %v1452, %v2285
    %2287 = vmatmul.f32.gmra.mxu0 %v1750
    %v2288 = vpop.f32.mrf.mxu0
    %v2289 = vadd.f32 %v1452, %v2288
    %2290 = vmatmul.f32.gmra.mxu0 %v1753
    %v2291 = vpop.f32.mrf.mxu0
    %v2292 = vadd.f32 %v1452, %v2291
    %2293 = vmatmul.f32.gmra.mxu0 %v1756
    %v2294 = vpop.f32.mrf.mxu0
    %v2295 = vadd.f32 %v1452, %v2294
    %2296 = vmatmul.f32.gmra.mxu0 %v1759
    %v2297 = vpop.f32.mrf.mxu0
    %v2298 = vadd.f32 %v1452, %v2297
    %2299 = vmatmul.f32.gmra.mxu0 %v1762
    %v2300 = vpop.f32.mrf.mxu0
    %v2301 = vadd.f32 %v1452, %v2300
    %2302 = vmatmul.f32.gmra.mxu0 %v1765
    %v2303 = vpop.f32.mrf.mxu0
    %v2304 = vadd.f32 %v1452, %v2303
    %2305 = vmatmul.f32.gmra.mxu0 %v1768
    %v2306 = vpop.f32.mrf.mxu0
    %v2307 = vadd.f32 %v1452, %v2306
    %2308 = vmatmul.f32.gmra.mxu0 %v1771
    %v2309 = vpop.f32.mrf.mxu0
    %v2310 = vadd.f32 %v1452, %v2309
    %2311 = vmatmul.f32.gmra.mxu0 %v1774
    %v2312 = vpop.f32.mrf.mxu0
    %v2313 = vadd.f32 %v1452, %v2312
    %2314 = vmatmul.f32.gmra.mxu0 %v1777
    %v2315 = vpop.f32.mrf.mxu0
    %v2316 = vadd.f32 %v1452, %v2315
    %2317 = vmatmul.f32.gmra.mxu0 %v1780
    %v2318 = vpop.f32.mrf.mxu0
    %v2319 = vadd.f32 %v1452, %v2318
    %2320 = vmatmul.f32.gmra.mxu0 %v1783
    %v2321 = vpop.f32.mrf.mxu0
    %v2322 = vadd.f32 %v1452, %v2321
    %2323 = vmatmul.f32.gmra.mxu0 %v1786
    %v2324 = vpop.f32.mrf.mxu0
    %v2325 = vadd.f32 %v1452, %v2324
    %2326 = vmatmul.f32.gmra.mxu0 %v1789
    %v2327 = vpop.f32.mrf.mxu0
    %v2328 = vadd.f32 %v1452, %v2327
    %2329 = vmatmul.f32.gmra.mxu0 %v1792
    %v2330 = vpop.f32.mrf.mxu0
    %v2331 = vadd.f32 %v1452, %v2330
    %2332 = vmatmul.f32.gmra.mxu0 %v1795
    %v2333 = vpop.f32.mrf.mxu0
    %v2334 = vadd.f32 %v1452, %v2333
    %2335 = vmatmul.f32.gmra.mxu0 %v1798
    %v2336 = vpop.f32.mrf.mxu0
    %v2337 = vadd.f32 %v1452, %v2336
    %2338 = vmatmul.f32.gmra.mxu0 %v1801
    %v2339 = vpop.f32.mrf.mxu0
    %v2340 = vadd.f32 %v1452, %v2339
    %2341 = vmatmul.f32.gmra.mxu0 %v1804
    %v2342 = vpop.f32.mrf.mxu0
    %v2343 = vadd.f32 %v1452, %v2342
    %2344 = vmatmul.f32.gmra.mxu0 %v1807
    %v2345 = vpop.f32.mrf.mxu0
    %v2346 = vadd.f32 %v1452, %v2345
    %2347 = vmatmul.f32.gmra.mxu0 %v1810
    %v2348 = vpop.f32.mrf.mxu0
    %v2349 = vadd.f32 %v1452, %v2348
    %2350 = vmatmul.f32.gmra.mxu0 %v1813
    %v2351 = vpop.f32.mrf.mxu0
    %v2352 = vadd.f32 %v1452, %v2351
    %2353 = vmatmul.f32.gmra.mxu0 %v1816
    %v2354 = vpop.f32.mrf.mxu0
    %v2355 = vadd.f32 %v1452, %v2354
    %2356 = vmatmul.f32.gmra.mxu0 %v1819
    %v2357 = vpop.f32.mrf.mxu0
    %v2358 = vadd.f32 %v1452, %v2357
    %2359 = vmatmul.f32.gmra.mxu0 %v1822
    %v2360 = vpop.f32.mrf.mxu0
    %v2361 = vadd.f32 %v1452, %v2360
    %2362 = vmatmul.f32.gmra.mxu0 %v1825
    %v2363 = vpop.f32.mrf.mxu0
    %v2364 = vadd.f32 %v1452, %v2363
    %2365 = vmatmul.f32.gmra.mxu0 %v1828
    %v2366 = vpop.f32.mrf.mxu0
    %v2367 = vadd.f32 %v1452, %v2366
    %2368 = vmatmul.f32.gmra.mxu0 %v1831
    %v2369 = vpop.f32.mrf.mxu0
    %v2370 = vadd.f32 %v1452, %v2369
    %2371 = vmatmul.f32.gmra.mxu0 %v1834
    %v2372 = vpop.f32.mrf.mxu0
    %v2373 = vadd.f32 %v1452, %v2372
    %2374 = vmatmul.f32.gmra.mxu0 %v1837
    %v2375 = vpop.f32.mrf.mxu0
    %v2376 = vadd.f32 %v1452, %v2375
    %2377 = vmatmul.f32.gmra.mxu0 %v1840
    %v2378 = vpop.f32.mrf.mxu0
    %v2379 = vadd.f32 %v1452, %v2378
    %2380 = vmatmul.f32.gmra.mxu0 %v1843
    %v2381 = vpop.f32.mrf.mxu0
    %v2382 = vadd.f32 %v1452, %v2381
    %2383 = vmatmul.f32.gmra.mxu0 %v1846
    %v2384 = vpop.f32.mrf.mxu0
    %v2385 = vadd.f32 %v1452, %v2384
    %2386 = vmatmul.f32.gmra.mxu0 %v1849
    %v2387 = vpop.f32.mrf.mxu0
    %v2388 = vadd.f32 %v1452, %v2387
    %2389 = vmatmul.f32.gmra.mxu0 %v1852
    %v2390 = vpop.f32.mrf.mxu0
    %v2391 = vadd.f32 %v1452, %v2390
    %2392 = vmatmul.f32.gmra.mxu0 %v1855
    %v2393 = vpop.f32.mrf.mxu0
    %v2394 = vadd.f32 %v1452, %v2393
    %2395 = vmatmul.f32.gmra.mxu0 %v1858
    %v2396 = vpop.f32.mrf.mxu0
    %v2397 = vadd.f32 %v1452, %v2396
    %2398 = vmatmul.f32.gmra.mxu0 %v1861
    %v2399 = vpop.f32.mrf.mxu0
    %v2400 = vadd.f32 %v1452, %v2399
    %2401 = vmatmul.f32.gmra.mxu0 %v1864
    %v2402 = vpop.f32.mrf.mxu0
    %v2403 = vadd.f32 %v1452, %v2402
    %2404 = vmatmul.f32.gmra.mxu0 %v1867
    %v2405 = vpop.f32.mrf.mxu0
    %v2406 = vadd.f32 %v1452, %v2405
    %2407 = vmatmul.f32.gmra.mxu0 %v1870
    %v2408 = vpop.f32.mrf.mxu0
    %v2409 = vadd.f32 %v1452, %v2408
    %2410 = vmatmul.f32.gmra.mxu0 %v1873
    %v2411 = vpop.f32.mrf.mxu0
    %v2412 = vadd.f32 %v1452, %v2411
    %2413 = vmatmul.f32.gmra.mxu0 %v1876
    %v2414 = vpop.f32.mrf.mxu0
    %v2415 = vadd.f32 %v1452, %v2414
    %2416 = vmatmul.f32.gmra.mxu0 %v1879
    %v2417 = vpop.f32.mrf.mxu0
    %v2418 = vadd.f32 %v1452, %v2417
    %2419 = vmatmul.f32.gmra.mxu0 %v1882
    %v2420 = vpop.f32.mrf.mxu0
    %v2421 = vadd.f32 %v1452, %v2420
    %2422 = vmatmul.f32.gmra.mxu0 %v1885
    %v2423 = vpop.f32.mrf.mxu0
    %v2424 = vadd.f32 %v1452, %v2423
    %2425 = vmatmul.f32.gmra.mxu0 %v1888
    %v2426 = vpop.f32.mrf.mxu0
    %v2427 = vadd.f32 %v1452, %v2426
    %2428 = vmatmul.f32.gmra.mxu0 %v1891
    %v2429 = vpop.f32.mrf.mxu0
    %v2430 = vadd.f32 %v1452, %v2429
    %2431 = vmatmul.f32.gmra.mxu0 %v1894
    %v2432 = vpop.f32.mrf.mxu0
    %v2433 = vadd.f32 %v1452, %v2432
    %2434 = vmatmul.f32.gmra.mxu0 %v1897
    %v2435 = vpop.f32.mrf.mxu0
    %v2436 = vadd.f32 %v1452, %v2435
    %2437 = vmatmul.f32.gmra.mxu0 %v1900
    %v2438 = vpop.f32.mrf.mxu0
    %v2439 = vadd.f32 %v1452, %v2438
    %2440 = vmatmul.f32.gmra.mxu0 %v1903
    %v2441 = vpop.f32.mrf.mxu0
    %v2442 = vadd.f32 %v1452, %v2441
    %2443 = vmatmul.f32.gmra.mxu0 %v1906
    %v2444 = vpop.f32.mrf.mxu0
    %v2445 = vadd.f32 %v1452, %v2444
    %2446 = vmatmul.f32.gmra.mxu0 %v1909
    %v2447 = vpop.f32.mrf.mxu0
    %v2448 = vadd.f32 %v1452, %v2447
    %2449 = vmatmul.f32.gmra.mxu0 %v1912
    %v2450 = vpop.f32.mrf.mxu0
    %v2451 = vadd.f32 %v1452, %v2450
    %2452 = vmatmul.f32.gmra.mxu0 %v1915
    %v2453 = vpop.f32.mrf.mxu0
    %v2454 = vadd.f32 %v1452, %v2453
    %2455 = vmatmul.f32.gmra.mxu0 %v1918
    %v2456 = vpop.f32.mrf.mxu0
    %v2457 = vadd.f32 %v1452, %v2456
    %2458 = vmatmul.f32.gmra.mxu0 %v1921
    %v2459 = vpop.f32.mrf.mxu0
    %v2460 = vadd.f32 %v1452, %v2459
    %2461 = vmatmul.f32.gmra.mxu0 %v1924
    %v2462 = vpop.f32.mrf.mxu0
    %v2463 = vadd.f32 %v1452, %v2462
    %2464 = vmatmul.f32.gmra.mxu0 %v1927
    %v2465 = vpop.f32.mrf.mxu0
    %v2466 = vadd.f32 %v1452, %v2465
    %2467 = vmatmul.f32.gmra.mxu0 %v1930
    %v2468 = vpop.f32.mrf.mxu0
    %v2469 = vadd.f32 %v1452, %v2468
    %2470 = vmatmul.f32.gmra.mxu0 %v1933
    %v2471 = vpop.f32.mrf.mxu0
    %v2472 = vadd.f32 %v1452, %v2471
    %2473 = vmatmul.f32.gmra.mxu0 %v1936
    %v2474 = vpop.f32.mrf.mxu0
    %v2475 = vadd.f32 %v1452, %v2474
    %2476 = vmatmul.f32.gmra.mxu0 %v1939
    %v2477 = vpop.f32.mrf.mxu0
    %v2478 = vadd.f32 %v1452, %v2477
    %2479 = vmatmul.f32.gmra.mxu0 %v1942
    %v2480 = vpop.f32.mrf.mxu0
    %v2481 = vadd.f32 %v1452, %v2480
    %2482 = vmatmul.f32.gmra.mxu0 %v1945
    %v2483 = vpop.f32.mrf.mxu0
    %v2484 = vadd.f32 %v1452, %v2483
    %2485 = vmatmul.f32.gmra.mxu0 %v1948
    %v2486 = vpop.f32.mrf.mxu0
    %v2487 = vadd.f32 %v1452, %v2486
    %2488 = vmatmul.f32.gmra.mxu0 %v1951
    %v2489 = vpop.f32.mrf.mxu0
    %v2490 = vadd.f32 %v1452, %v2489
    %2491 = vmatmul.f32.gmra.mxu0 %v1954
    %v2492 = vpop.f32.mrf.mxu0
    %v2493 = vadd.f32 %v1452, %v2492
    %2494 = vmatmul.f32.gmra.mxu0 %v1957
    %v2495 = vpop.f32.mrf.mxu0
    %v2496 = vadd.f32 %v1452, %v2495
    %2497 = vmatmul.f32.gmra.mxu0 %v1960
    %v2498 = vpop.f32.mrf.mxu0
    %v2499 = vadd.f32 %v1452, %v2498
    %2500 = vmatmul.f32.gmra.mxu0 %v1963
    %v2501 = vpop.f32.mrf.mxu0
    %v2502 = vadd.f32 %v1452, %v2501
    %2503 = vmatmul.f32.gmra.mxu0 %v1966
    %v2504 = vpop.f32.mrf.mxu0
    %v2505 = vadd.f32 %v1452, %v2504
    %2506 = vmatmul.f32.gmra.mxu0 %v1969
    %v2507 = vpop.f32.mrf.mxu0
    %v2508 = vadd.f32 %v1452, %v2507
    %2509 = vmatmul.f32.gmra.mxu0 %v1972
    %v2510 = vpop.f32.mrf.mxu0
    %v2511 = vadd.f32 %v1452, %v2510
    %2512 = vmatmul.f32.gmra.mxu0 %v1975
    %v2513 = vpop.f32.mrf.mxu0
    %v2514 = vadd.f32 %v1452, %v2513
    %2515 = vdwg.mxu0
    %v2516 = vmax.f32 %v1995, 0.0
    %v2517 = vmax.f32 %v1998, 0.0
    %v2518 = vmax.f32 %v2001, 0.0
    %v2519 = vmax.f32 %v2004, 0.0
    %v2520 = vmax.f32 %v2007, 0.0
    %v2521 = vmax.f32 %v2010, 0.0
    %v2522 = vmax.f32 %v2013, 0.0
    %v2523 = vmax.f32 %v2016, 0.0
    %v2524 = vmax.f32 %v2019, 0.0
    %v2525 = vmax.f32 %v2022, 0.0
    %v2526 = vmax.f32 %v2025, 0.0
    %v2527 = vmax.f32 %v2028, 0.0
    %v2528 = vmax.f32 %v2031, 0.0
    %v2529 = vmax.f32 %v2034, 0.0
    %v2530 = vmax.f32 %v2037, 0.0
    %v2531 = vmax.f32 %v2040, 0.0
    %v2532 = vmax.f32 %v2043, 0.0
    %v2533 = vmax.f32 %v2046, 0.0
    %v2534 = vmax.f32 %v2049, 0.0
    %v2535 = vmax.f32 %v2052, 0.0
    %v2536 = vmax.f32 %v2055, 0.0
    %v2537 = vmax.f32 %v2058, 0.0
    %v2538 = vmax.f32 %v2061, 0.0
    %v2539 = vmax.f32 %v2064, 0.0
    %v2540 = vmax.f32 %v2067, 0.0
    %v2541 = vmax.f32 %v2070, 0.0
    %v2542 = vmax.f32 %v2073, 0.0
    %v2543 = vmax.f32 %v2076, 0.0
    %v2544 = vmax.f32 %v2079, 0.0
    %v2545 = vmax.f32 %v2082, 0.0
    %v2546 = vmax.f32 %v2085, 0.0
    %v2547 = vmax.f32 %v2088, 0.0
    %v2548 = vmax.f32 %v2091, 0.0
    %v2549 = vmax.f32 %v2094, 0.0
    %v2550 = vmax.f32 %v2097, 0.0
    %v2551 = vmax.f32 %v2100, 0.0
    %v2552 = vmax.f32 %v2103, 0.0
    %v2553 = vmax.f32 %v2106, 0.0
    %v2554 = vmax.f32 %v2109, 0.0
    %v2555 = vmax.f32 %v2112, 0.0
    %v2556 = vmax.f32 %v2115, 0.0
    %v2557 = vmax.f32 %v2118, 0.0
    %v2558 = vmax.f32 %v2121, 0.0
    %v2559 = vmax.f32 %v2124, 0.0
    %v2560 = vmax.f32 %v2127, 0.0
    %v2561 = vmax.f32 %v2130, 0.0
    %v2562 = vmax.f32 %v2133, 0.0
    %v2563 = vmax.f32 %v2136, 0.0
    %v2564 = vmax.f32 %v2139, 0.0
    %v2565 = vmax.f32 %v2142, 0.0
    %v2566 = vmax.f32 %v2145, 0.0
    %v2567 = vmax.f32 %v2148, 0.0
    %v2568 = vmax.f32 %v2151, 0.0
    %v2569 = vmax.f32 %v2154, 0.0
    %v2570 = vmax.f32 %v2157, 0.0
    %v2571 = vmax.f32 %v2160, 0.0
    %v2572 = vmax.f32 %v2163, 0.0
    %v2573 = vmax.f32 %v2166, 0.0
    %v2574 = vmax.f32 %v2169, 0.0
    %v2575 = vmax.f32 %v2172, 0.0
    %v2576 = vmax.f32 %v2175, 0.0
    %v2577 = vmax.f32 %v2178, 0.0
    %v2578 = vmax.f32 %v2181, 0.0
    %v2579 = vmax.f32 %v2184, 0.0
    %v2580 = vmax.f32 %v2187, 0.0
    %v2581 = vmax.f32 %v2190, 0.0
    %v2582 = vmax.f32 %v2193, 0.0
    %v2583 = vmax.f32 %v2196, 0.0
    %v2584 = vmax.f32 %v2199, 0.0
    %v2585 = vmax.f32 %v2202, 0.0
    %v2586 = vmax.f32 %v2205, 0.0
    %v2587 = vmax.f32 %v2208, 0.0
    %v2588 = vmax.f32 %v2211, 0.0
    %v2589 = vmax.f32 %v2214, 0.0
    %v2590 = vmax.f32 %v2217, 0.0
    %v2591 = vmax.f32 %v2220, 0.0
    %v2592 = vmax.f32 %v2223, 0.0
    %v2593 = vmax.f32 %v2226, 0.0
    %v2594 = vmax.f32 %v2229, 0.0
    %v2595 = vmax.f32 %v2232, 0.0
    %v2596 = vmax.f32 %v2235, 0.0
    %v2597 = vmax.f32 %v2238, 0.0
    %v2598 = vmax.f32 %v2241, 0.0
    %v2599 = vmax.f32 %v2244, 0.0
    %v2600 = vmax.f32 %v2247, 0.0
    %v2601 = vmax.f32 %v2250, 0.0
    %v2602 = vmax.f32 %v2253, 0.0
    %v2603 = vmax.f32 %v2256, 0.0
    %v2604 = vmax.f32 %v2259, 0.0
    %v2605 = vmax.f32 %v2262, 0.0
    %v2606 = vmax.f32 %v2265, 0.0
    %v2607 = vmax.f32 %v2268, 0.0
    %v2608 = vmax.f32 %v2271, 0.0
    %v2609 = vmax.f32 %v2274, 0.0
    %v2610 = vmax.f32 %v2277, 0.0
    %v2611 = vmax.f32 %v2280, 0.0
    %v2612 = vmax.f32 %v2283, 0.0
    %v2613 = vmax.f32 %v2286, 0.0
    %v2614 = vmax.f32 %v2289, 0.0
    %v2615 = vmax.f32 %v2292, 0.0
    %v2616 = vmax.f32 %v2295, 0.0
    %v2617 = vmax.f32 %v2298, 0.0
    %v2618 = vmax.f32 %v2301, 0.0
    %v2619 = vmax.f32 %v2304, 0.0
    %v2620 = vmax.f32 %v2307, 0.0
    %v2621 = vmax.f32 %v2310, 0.0
    %v2622 = vmax.f32 %v2313, 0.0
    %v2623 = vmax.f32 %v2316, 0.0
    %v2624 = vmax.f32 %v2319, 0.0
    %v2625 = vmax.f32 %v2322, 0.0
    %v2626 = vmax.f32 %v2325, 0.0
    %v2627 = vmax.f32 %v2328, 0.0
    %v2628 = vmax.f32 %v2331, 0.0
    %v2629 = vmax.f32 %v2334, 0.0
    %v2630 = vmax.f32 %v2337, 0.0
    %v2631 = vmax.f32 %v2340, 0.0
    %v2632 = vmax.f32 %v2343, 0.0
    %v2633 = vmax.f32 %v2346, 0.0
    %v2634 = vmax.f32 %v2349, 0.0
    %v2635 = vmax.f32 %v2352, 0.0
    %v2636 = vmax.f32 %v2355, 0.0
    %v2637 = vmax.f32 %v2358, 0.0
    %v2638 = vmax.f32 %v2361, 0.0
    %v2639 = vmax.f32 %v2364, 0.0
    %v2640 = vmax.f32 %v2367, 0.0
    %v2641 = vmax.f32 %v2370, 0.0
    %v2642 = vmax.f32 %v2373, 0.0
    %v2643 = vmax.f32 %v2376, 0.0
    %v2644 = vmax.f32 %v2379, 0.0
    %v2645 = vmax.f32 %v2382, 0.0
    %v2646 = vmax.f32 %v2385, 0.0
    %v2647 = vmax.f32 %v2388, 0.0
    %v2648 = vmax.f32 %v2391, 0.0
    %v2649 = vmax.f32 %v2394, 0.0
    %v2650 = vmax.f32 %v2397, 0.0
    %v2651 = vmax.f32 %v2400, 0.0
    %v2652 = vmax.f32 %v2403, 0.0
    %v2653 = vmax.f32 %v2406, 0.0
    %v2654 = vmax.f32 %v2409, 0.0
    %v2655 = vmax.f32 %v2412, 0.0
    %v2656 = vmax.f32 %v2415, 0.0
    %v2657 = vmax.f32 %v2418, 0.0
    %v2658 = vmax.f32 %v2421, 0.0
    %v2659 = vmax.f32 %v2424, 0.0
    %v2660 = vmax.f32 %v2427, 0.0
    %v2661 = vmax.f32 %v2430, 0.0
    %v2662 = vmax.f32 %v2433, 0.0
    %v2663 = vmax.f32 %v2436, 0.0
    %v2664 = vmax.f32 %v2439, 0.0
    %v2665 = vmax.f32 %v2442, 0.0
    %v2666 = vmax.f32 %v2445, 0.0
    %v2667 = vmax.f32 %v2448, 0.0
    %v2668 = vmax.f32 %v2451, 0.0
    %v2669 = vmax.f32 %v2454, 0.0
    %v2670 = vmax.f32 %v2457, 0.0
    %v2671 = vmax.f32 %v2460, 0.0
    %v2672 = vmax.f32 %v2463, 0.0
    %v2673 = vmax.f32 %v2466, 0.0
    %v2674 = vmax.f32 %v2469, 0.0
    %v2675 = vmax.f32 %v2472, 0.0
    %v2676 = vmax.f32 %v2475, 0.0
    %v2677 = vmax.f32 %v2478, 0.0
    %v2678 = vmax.f32 %v2481, 0.0
    %v2679 = vmax.f32 %v2484, 0.0
    %v2680 = vmax.f32 %v2487, 0.0
    %v2681 = vmax.f32 %v2490, 0.0
    %v2682 = vmax.f32 %v2493, 0.0
    %v2683 = vmax.f32 %v2496, 0.0
    %v2684 = vmax.f32 %v2499, 0.0
    %v2685 = vmax.f32 %v2502, 0.0
    %v2686 = vmax.f32 %v2505, 0.0
    %v2687 = vmax.f32 %v2508, 0.0
    %v2688 = vmax.f32 %v2511, 0.0
    %v2689 = vmax.f32 %v2514, 0.0
    %v2690 = vld [vmem:[%s5] sm:$0x3f]
    %v2691 = vld [vmem:[%s5 + $0x8] sm:$0x3f]
    %v2692 = vld [vmem:[%s5 + $0x10] sm:$0x3f]
    %v2693 = vld [vmem:[%s5 + $0x18] sm:$0x3f]
    %v2694 = vld [vmem:[%s5 + $0x20] sm:$0x3f]
    %v2695 = vld [vmem:[%s5 + $0x28] sm:$0x3f]
    %v2696 = vld [vmem:[%s5 + $0x30] sm:$0x3f]
    %v2697 = vld [vmem:[%s5 + $0x38] sm:$0x3f]
    %v2698 = vld [vmem:[%s5 + $0x40] sm:$0x3f]
    %v2699 = vld [vmem:[%s5 + $0x48] sm:$0x3f]
    %v2700 = vld [vmem:[%s5 + $0x50] sm:$0x3f]
    %vm2701 = vcmask 916480
    %v2703 = vsel %vm2701, %v2700, 0
    %2705 = vmatpush.msra.mxu0 %v2531
    %2706 = vmatpush.msra.mxu0 %v2530
    %2707 = vmatpush.msra.mxu0 %v2529
    %2708 = vmatpush.msra.mxu0 %v2528
    %2709 = vmatpush.msra.mxu0 %v2527
    %2710 = vmatpush.msra.mxu0 %v2526
    %2711 = vmatpush.msra.mxu0 %v2525
    %2712 = vmatpush.msra.mxu0 %v2524
    %2713 = vmatpush.msra.mxu0 %v2523
    %2714 = vmatpush.msra.mxu0 %v2522
    %2715 = vmatpush.msra.mxu0 %v2521
    %2716 = vmatpush.msra.mxu0 %v2520
    %2717 = vmatpush.msra.mxu0 %v2519
    %2718 = vmatpush.msra.mxu0 %v2518
    %2719 = vmatpush.msra.mxu0 %v2517
    %2720 = vmatpush.msra.mxu0 %v2516
    %2721 = vmatmul.f32.gmra.mxu0 %v2690
    %v2722 = vpop.f32.mrf.mxu0
    %v2723 = vadd.f32 0.0, %v2722
    %2724 = vdwg.mxu0
    %2725 = vmatpush.msra.mxu0 %v2547
    %2726 = vmatpush.msra.mxu0 %v2546
    %2727 = vmatpush.msra.mxu0 %v2545
    %2728 = vmatpush.msra.mxu0 %v2544
    %2729 = vmatpush.msra.mxu0 %v2543
    %2730 = vmatpush.msra.mxu0 %v2542
    %2731 = vmatpush.msra.mxu0 %v2541
    %2732 = vmatpush.msra.mxu0 %v2540
    %2733 = vmatpush.msra.mxu0 %v2539
    %2734 = vmatpush.msra.mxu0 %v2538
    %2735 = vmatpush.msra.mxu0 %v2537
    %2736 = vmatpush.msra.mxu0 %v2536
    %2737 = vmatpush.msra.mxu0 %v2535
    %2738 = vmatpush.msra.mxu0 %v2534
    %2739 = vmatpush.msra.mxu0 %v2533
    %2740 = vmatpush.msra.mxu0 %v2532
    %2741 = vmatmul.f32.gmra.mxu0 %v2691
    %v2742 = vpop.f32.mrf.mxu0
    %v2743 = vadd.f32 %v2723, %v2742
    %2744 = vdwg.mxu0
    %2745 = vmatpush.msra.mxu0 %v2563
    %2746 = vmatpush.msra.mxu0 %v2562
    %2747 = vmatpush.msra.mxu0 %v2561
    %2748 = vmatpush.msra.mxu0 %v2560
    %2749 = vmatpush.msra.mxu0 %v2559
    %2750 = vmatpush.msra.mxu0 %v2558
    %2751 = vmatpush.msra.mxu0 %v2557
    %2752 = vmatpush.msra.mxu0 %v2556
    %2753 = vmatpush.msra.mxu0 %v2555
    %2754 = vmatpush.msra.mxu0 %v2554
    %2755 = vmatpush.msra.mxu0 %v2553
    %2756 = vmatpush.msra.mxu0 %v2552
    %2757 = vmatpush.msra.mxu0 %v2551
    %2758 = vmatpush.msra.mxu0 %v2550
    %2759 = vmatpush.msra.mxu0 %v2549
    %2760 = vmatpush.msra.mxu0 %v2548
    %2761 = vmatmul.f32.gmra.mxu0 %v2692
    %v2762 = vpop.f32.mrf.mxu0
    %v2763 = vadd.f32 %v2743, %v2762
    %2764 = vdwg.mxu0
    %2765 = vmatpush.msra.mxu0 %v2579
    %2766 = vmatpush.msra.mxu0 %v2578
    %2767 = vmatpush.msra.mxu0 %v2577
    %2768 = vmatpush.msra.mxu0 %v2576
    %2769 = vmatpush.msra.mxu0 %v2575
    %2770 = vmatpush.msra.mxu0 %v2574
    %2771 = vmatpush.msra.mxu0 %v2573
    %2772 = vmatpush.msra.mxu0 %v2572
    %2773 = vmatpush.msra.mxu0 %v2571
    %2774 = vmatpush.msra.mxu0 %v2570
    %2775 = vmatpush.msra.mxu0 %v2569
    %2776 = vmatpush.msra.mxu0 %v2568
    %2777 = vmatpush.msra.mxu0 %v2567
    %2778 = vmatpush.msra.mxu0 %v2566
    %2779 = vmatpush.msra.mxu0 %v2565
    %2780 = vmatpush.msra.mxu0 %v2564
    %2781 = vmatmul.f32.gmra.mxu0 %v2693
    %v2782 = vpop.f32.mrf.mxu0
    %v2783 = vadd.f32 %v2763, %v2782
    %2784 = vdwg.mxu0
    %2785 = vmatpush.msra.mxu0 %v2595
    %2786 = vmatpush.msra.mxu0 %v2594
    %2787 = vmatpush.msra.mxu0 %v2593
    %2788 = vmatpush.msra.mxu0 %v2592
    %2789 = vmatpush.msra.mxu0 %v2591
    %2790 = vmatpush.msra.mxu0 %v2590
    %2791 = vmatpush.msra.mxu0 %v2589
    %2792 = vmatpush.msra.mxu0 %v2588
    %2793 = vmatpush.msra.mxu0 %v2587
    %2794 = vmatpush.msra.mxu0 %v2586
    %2795 = vmatpush.msra.mxu0 %v2585
    %2796 = vmatpush.msra.mxu0 %v2584
    %2797 = vmatpush.msra.mxu0 %v2583
    %2798 = vmatpush.msra.mxu0 %v2582
    %2799 = vmatpush.msra.mxu0 %v2581
    %2800 = vmatpush.msra.mxu0 %v2580
    %2801 = vmatmul.f32.gmra.mxu0 %v2694
    %v2802 = vpop.f32.mrf.mxu0
    %v2803 = vadd.f32 %v2783, %v2802
    %2804 = vdwg.mxu0
    %2805 = vmatpush.msra.mxu0 %v2611
    %2806 = vmatpush.msra.mxu0 %v2610
    %2807 = vmatpush.msra.mxu0 %v2609
    %2808 = vmatpush.msra.mxu0 %v2608
    %2809 = vmatpush.msra.mxu0 %v2607
    %2810 = vmatpush.msra.mxu0 %v2606
    %2811 = vmatpush.msra.mxu0 %v2605
    %2812 = vmatpush.msra.mxu0 %v2604
    %2813 = vmatpush.msra.mxu0 %v2603
    %2814 = vmatpush.msra.mxu0 %v2602
    %2815 = vmatpush.msra.mxu0 %v2601
    %2816 = vmatpush.msra.mxu0 %v2600
    %2817 = vmatpush.msra.mxu0 %v2599
    %2818 = vmatpush.msra.mxu0 %v2598
    %2819 = vmatpush.msra.mxu0 %v2597
    %2820 = vmatpush.msra.mxu0 %v2596
    %2821 = vmatmul.f32.gmra.mxu0 %v2695
    %v2822 = vpop.f32.mrf.mxu0
    %v2823 = vadd.f32 %v2803, %v2822
    %2824 = vdwg.mxu0
    %2825 = vmatpush.msra.mxu0 %v2627
    %2826 = vmatpush.msra.mxu0 %v2626
    %2827 = vmatpush.msra.mxu0 %v2625
    %2828 = vmatpush.msra.mxu0 %v2624
    %2829 = vmatpush.msra.mxu0 %v2623
    %2830 = vmatpush.msra.mxu0 %v2622
    %2831 = vmatpush.msra.mxu0 %v2621
    %2832 = vmatpush.msra.mxu0 %v2620
    %2833 = vmatpush.msra.mxu0 %v2619
    %2834 = vmatpush.msra.mxu0 %v2618
    %2835 = vmatpush.msra.mxu0 %v2617
    %2836 = vmatpush.msra.mxu0 %v2616
    %2837 = vmatpush.msra.mxu0 %v2615
    %2838 = vmatpush.msra.mxu0 %v2614
    %2839 = vmatpush.msra.mxu0 %v2613
    %2840 = vmatpush.msra.mxu0 %v2612
    %2841 = vmatmul.f32.gmra.mxu0 %v2696
    %v2842 = vpop.f32.mrf.mxu0
    %v2843 = vadd.f32 %v2823, %v2842
    %2844 = vdwg.mxu0
    %2845 = vmatpush.msra.mxu0 %v2643
    %2846 = vmatpush.msra.mxu0 %v2642
    %2847 = vmatpush.msra.mxu0 %v2641
    %2848 = vmatpush.msra.mxu0 %v2640
    %2849 = vmatpush.msra.mxu0 %v2639
    %2850 = vmatpush.msra.mxu0 %v2638
    %2851 = vmatpush.msra.mxu0 %v2637
    %2852 = vmatpush.msra.mxu0 %v2636
    %2853 = vmatpush.msra.mxu0 %v2635
    %2854 = vmatpush.msra.mxu0 %v2634
    %2855 = vmatpush.msra.mxu0 %v2633
    %2856 = vmatpush.msra.mxu0 %v2632
    %2857 = vmatpush.msra.mxu0 %v2631
    %2858 = vmatpush.msra.mxu0 %v2630
    %2859 = vmatpush.msra.mxu0 %v2629
    %2860 = vmatpush.msra.mxu0 %v2628
    %2861 = vmatmul.f32.gmra.mxu0 %v2697
    %v2862 = vpop.f32.mrf.mxu0
    %v2863 = vadd.f32 %v2843, %v2862
    %2864 = vdwg.mxu0
    %2865 = vmatpush.msra.mxu0 %v2659
    %2866 = vmatpush.msra.mxu0 %v2658
    %2867 = vmatpush.msra.mxu0 %v2657
    %2868 = vmatpush.msra.mxu0 %v2656
    %2869 = vmatpush.msra.mxu0 %v2655
    %2870 = vmatpush.msra.mxu0 %v2654
    %2871 = vmatpush.msra.mxu0 %v2653
    %2872 = vmatpush.msra.mxu0 %v2652
    %2873 = vmatpush.msra.mxu0 %v2651
    %2874 = vmatpush.msra.mxu0 %v2650
    %2875 = vmatpush.msra.mxu0 %v2649
    %2876 = vmatpush.msra.mxu0 %v2648
    %2877 = vmatpush.msra.mxu0 %v2647
    %2878 = vmatpush.msra.mxu0 %v2646
    %2879 = vmatpush.msra.mxu0 %v2645
    %2880 = vmatpush.msra.mxu0 %v2644
    %2881 = vmatmul.f32.gmra.mxu0 %v2698
    %v2882 = vpop.f32.mrf.mxu0
    %v2883 = vadd.f32 %v2863, %v2882
    %2884 = vdwg.mxu0
    %2885 = vmatpush.msra.mxu0 %v2675
    %2886 = vmatpush.msra.mxu0 %v2674
    %2887 = vmatpush.msra.mxu0 %v2673
    %2888 = vmatpush.msra.mxu0 %v2672
    %2889 = vmatpush.msra.mxu0 %v2671
    %2890 = vmatpush.msra.mxu0 %v2670
    %2891 = vmatpush.msra.mxu0 %v2669
    %2892 = vmatpush.msra.mxu0 %v2668
    %2893 = vmatpush.msra.mxu0 %v2667
    %2894 = vmatpush.msra.mxu0 %v2666
    %2895 = vmatpush.msra.mxu0 %v2665
    %2896 = vmatpush.msra.mxu0 %v2664
    %2897 = vmatpush.msra.mxu0 %v2663
    %2898 = vmatpush.msra.mxu0 %v2662
    %2899 = vmatpush.msra.mxu0 %v2661
    %2900 = vmatpush.msra.mxu0 %v2660
    %2901 = vmatmul.f32.gmra.mxu0 %v2699
    %v2902 = vpop.f32.mrf.mxu0
    %v2903 = vadd.f32 %v2883, %v2902
    %2904 = vdwg.mxu0
    %2905 = vmatpush.msra.mxu0 0.0
    %2906 = vmatpush.msra.mxu0 0.0
    %2907 = vmatpush.msra.mxu0 %v2689
    %2908 = vmatpush.msra.mxu0 %v2688
    %2909 = vmatpush.msra.mxu0 %v2687
    %2910 = vmatpush.msra.mxu0 %v2686
    %2911 = vmatpush.msra.mxu0 %v2685
    %2912 = vmatpush.msra.mxu0 %v2684
    %2913 = vmatpush.msra.mxu0 %v2683
    %2914 = vmatpush.msra.mxu0 %v2682
    %2915 = vmatpush.msra.mxu0 %v2681
    %2916 = vmatpush.msra.mxu0 %v2680
    %2917 = vmatpush.msra.mxu0 %v2679
    %2918 = vmatpush.msra.mxu0 %v2678
    %2919 = vmatpush.msra.mxu0 %v2677
    %2920 = vmatpush.msra.mxu0 %v2676
    %2921 = vmatmul.f32.gmra.mxu0 %v2703
    %v2922 = vpop.f32.mrf.mxu0
    %v2923 = vadd.f32 %v2903, %v2922
    %2924 = vdwg.mxu0
    %v2925 = vld [vmem:[%s6] sm:$0xff]
    %v2926 = vld [vmem:[%s6 + $0x8] sm:$0xff]
    %v2927 = vld [vmem:[%s6 + $0x10] sm:$0xff]
    %v2928 = vld [vmem:[%s6 + $0x18] sm:$0xff]
    %v2929 = vld [vmem:[%s7] sm:$0x1]
    %v2931 = vperm.slane %v2929, 0
    %v2934 = vsel %vm1454, %v2923, 0
    %2936 = vmatpush.msra.mxu0 0.0
    %2937 = vmatpush.msra.mxu0 0.0
    %2938 = vmatpush.msra.mxu0 0.0
    %2939 = vmatpush.msra.mxu0 0.0
    %2940 = vmatpush.msra.mxu0 0.0
    %2941 = vmatpush.msra.mxu0 0.0
    %2942 = vmatpush.msra.mxu0 0.0
    %2943 = vmatpush.msra.mxu0 0.0
    %2944 = vmatpush.msra.mxu0 0.0
    %2945 = vmatpush.msra.mxu0 0.0
    %2946 = vmatpush.msra.mxu0 0.0
    %2947 = vmatpush.msra.mxu0 0.0
    %2948 = vmatpush.msra.mxu0 %v2928
    %2949 = vmatpush.msra.mxu0 %v2927
    %2950 = vmatpush.msra.mxu0 %v2926
    %2951 = vmatpush.msra.mxu0 %v2925
    %2952 = vmatmul.f32.gmra.mxu0 %v2934
    %v2953 = vpop.f32.mrf.mxu0
    %v2954 = vadd.f32 %v2931, %v2953
    %2955 = vdwg.mxu0
    %vm2956 = vcmask 62464
    %2957 = vst.msk [vmem:[#allocation2] sm:$0x3f] %vm2956, %v2954
    // Predicated region
    $region34: #{tpu_custom_call.1} parent=1 // pred_check
      _
    $region35: #{tpu_custom_call.1} parent=1 // pred_check_branch
      %2959 = sbr.rel (0) target = $region37
    $region36: #{tpu_custom_call.1} parent=1 // pred_region
      %2961 = vsyncadd [#allocation3], 0
      %s2963 = sshll.u32 [#allocation2], 4
      %s2964 = int_to_ptr.vmem [resolvable:$true] %s2963
      %s2965 = sshll.u32 %s8, 4
      %s2966 = int_to_ptr.hbm [resolvable:$true] %s2965
      %2968 = dma.vmem_to_hbm [thread:$0]  %s2964, 128, %s2966, [#allocation3]
    $region37: #{tpu_custom_call.1} parent=1 // pred_fallthru
      _
    // Predicated region
    $region38: #{tpu_custom_call.1} parent=1 // pred_check
      _
    $region39: #{tpu_custom_call.1} parent=1 // pred_check_branch
      %2970 = sbr.rel (0) target = $region41
    $region40: #{tpu_custom_call.1} parent=1 // pred_region
      %2972 = dma.done [#allocation3], 128
    $region41: #{tpu_custom_call.1} parent=1 // pred_fallthru
      _
    %2973 = vsyncpa [#allocation3], 1

</llo_original>
